<compile_context>
chip_gen: v6e
topology: v6e:2x2x1
jax: 0.10.0
libtpu: 0.0.40
codegen_flags: <defaults>
</compile_context>

<pallas_src>
import functools

import numpy as np
import jax
import jax.numpy as jnp
from jax.experimental import pallas as pl
from jax.experimental.pallas import tpu as pltpu


def _round_up(x, m):
    return (x + m - 1) // m * m


# ----------------------------------------------------------------------------
# Kernel 1: fused backbone conv (im2col matmul) + bias + ReLU + BOTH 1x1 heads.
# Transposed "feature-major" layout: pixel axis M = N*Ho*Wo is the lane (last)
# dim of every operand, so loads/stores are lane-dense.
# ----------------------------------------------------------------------------
def _fused_backbone_heads_kernel(p_ref, wbb_ref, bbb_ref, whd_ref, bhd_ref, o_ref):
    # p_ref   : (K, tm)   bf16  -- im2col patches (transposed)
    # wbb_ref : (Cf, K)   bf16  -- backbone conv weight
    # bbb_ref : (Cf, 1)   f32   -- backbone bias
    # whd_ref : (2nc, Cf) bf16  -- concatenated classifier + aux 1x1 weights
    # bhd_ref : (2nc, 1)  f32   -- concatenated biases
    # o_ref   : (2nc, tm) f32   -- logits for both heads (lane-dense)
    feat = jnp.dot(wbb_ref[...], p_ref[...], preferred_element_type=jnp.float32)
    feat = jnp.maximum(feat + bbb_ref[...], 0.0)               # bias + ReLU in f32
    logits = jnp.dot(whd_ref[...], feat.astype(jnp.bfloat16),  # bf16 MXU, f32 acc
                     preferred_element_type=jnp.float32)
    o_ref[...] = logits + bhd_ref[...]


def fused_backbone_heads(patches_t, wbb, bbb, whd, bhd):
    """patches_t: (K, M) bf16 -> logits (2nc, M) f32."""
    K, M = patches_t.shape
    Cf = wbb.shape[0]
    C2 = whd.shape[0]

    # Large M tile (per-step overhead >> DMA time at 1024 lanes), but keep
    # >= 2 grid steps when possible so both v7x TensorCores get work.
    m128 = _round_up(M, 128)
    tm = min(8192, m128)
    if m128 > 128 and m128 // tm < 2:
        tm = _round_up(m128 // 2, 128)
    m_pad = _round_up(M, tm)
    if m_pad != M:
        patches_t = jnp.pad(patches_t, ((0, 0), (0, m_pad - M)))

    out = pl.pallas_call(
        _fused_backbone_heads_kernel,
        out_shape=jax.ShapeDtypeStruct((C2, m_pad), jnp.float32),
        grid=(m_pad // tm,),
        in_specs=[
            pl.BlockSpec((K, tm), lambda i: (0, i)),
            pl.BlockSpec((Cf, K), lambda i: (0, 0)),
            pl.BlockSpec((Cf, 1), lambda i: (0, 0)),
            pl.BlockSpec((C2, Cf), lambda i: (0, 0)),
            pl.BlockSpec((C2, 1), lambda i: (0, 0)),
        ],
        out_specs=pl.BlockSpec((C2, tm), lambda i: (0, i)),
        compiler_params=pltpu.CompilerParams(
            dimension_semantics=("parallel",)),
    )(patches_t, wbb, bbb, whd, bhd)
    return out[:, :M]   # no-op slice when m_pad == M


# ----------------------------------------------------------------------------
# Kernel 2: bilinear upsample, G channel-planes of one batch element per step.
# Reads directly from the (2nc, N, Ho, Wo) logits view and writes directly into
# the (N, 2nc, H, W) result (the channel<->batch "transpose" is pure index_map
# plumbing, no extra HBM round trip).
# ----------------------------------------------------------------------------
def _bilinear_kernel(x_ref, wh_ref, wwt_ref, o_ref):
    # x_ref  : (G, 1, Hin, Win)   f32
    # wh_ref : (Hout, Hin)        f32
    # wwt_ref: (Win, Wout)        f32   (pre-transposed width matrix)
    # o_ref  : (1, G, Hout, Wout) f32
    G, _, h_in, w_in = x_ref.shape
    w_out = wwt_ref.shape[1]
    x = x_ref[...].reshape(G, h_in, w_in)
    # Width pass: one flat matmul over all G planes (no per-plane weight
    # broadcasts, better MXU occupancy than G tiny batched matmuls).
    t = jnp.dot(x.reshape(G * h_in, w_in), wwt_ref[...],
                preferred_element_type=jnp.float32).reshape(G, h_in, w_out)
    # Height pass: G small unrolled matmuls, single full-block store at the end.
    wh = wh_ref[...]
    planes = [jnp.dot(wh, t[g], preferred_element_type=jnp.float32)
              for g in range(G)]
    # TODO(synk): for tiny Wout (< 128 lanes) the store is masked; flattening
    # Hout*Wout into the lane axis would make it lane-dense at the cost of an
    # in-kernel relayout.
    o_ref[...] = jnp.stack(planes, axis=0)[None]


@functools.lru_cache(maxsize=None)
def _bilinear_matrix(out_size, in_size):
    """Interpolation matrix matching PyTorch bilinear, align_corners=False."""
    o = np.arange(out_size, dtype=np.float64)
    src = (o + 0.5) * (in_size / out_size) - 0.5
    src = np.maximum(src, 0.0)
    i0 = np.clip(np.floor(src).astype(np.int64), 0, in_size - 1)
    i1 = np.minimum(i0 + 1, in_size - 1)
    lam = src - i0
    w = np.zeros((out_size, in_size), dtype=np.float64)
    np.add.at(w, (np.arange(out_size), i0), 1.0 - lam)
    np.add.at(w, (np.arange(out_size), i1), lam)
    return w.astype(np.float32)


def bilinear_upsample_to_nchw(logits_cnhw, h_out, w_out):
    """logits_cnhw: (C2, Nb, Hin, Win) f32 -> (Nb, C2, Hout, Wout) f32."""
    C2, Nb, h_in, w_in = logits_cnhw.shape
    wh = jnp.asarray(_bilinear_matrix(h_out, h_in))          # (Hout, Hin)
    wwt = jnp.asarray(_bilinear_matrix(w_out, w_in).T)       # (Win, Wout)

    # Planes per grid step: largest divisor of C2 (<= 8) keeping the
    # double-buffered f32 output block under ~6 MiB (fits v5e's 16 MiB scoped
    # default and well within the v7x VMEM budget).
    g_budget = max(1, (6 << 20) // max(1, h_out * w_out * 4 * 2))
    G = 1
    for d in range(1, min(C2, 8, g_budget) + 1):
        if C2 % d == 0:
            G = d

    out = pl.pallas_call(
        _bilinear_kernel,
        out_shape=jax.ShapeDtypeStruct((Nb, C2, h_out, w_out), jnp.float32),
        grid=(Nb, C2 // G),
        in_specs=[
            pl.BlockSpec((G, 1, h_in, w_in), lambda b, c: (c, b, 0, 0)),
            pl.BlockSpec((h_out, h_in), lambda b, c: (0, 0)),
            pl.BlockSpec((w_in, w_out), lambda b, c: (0, 0)),
        ],
        out_specs=pl.BlockSpec((1, G, h_out, w_out), lambda b, c: (b, c, 0, 0)),
        compiler_params=pltpu.CompilerParams(
            dimension_semantics=("parallel", "parallel")),
    )(logits_cnhw.astype(jnp.float32), wh, wwt)
    return out


# ----------------------------------------------------------------------------
# Transposed im2col for the 3x3 / stride-2 / pad-1 backbone conv (plain JAX,
# runs in bf16 so the materialized patch array is half-size).
# ----------------------------------------------------------------------------
def _im2col_3x3_s2_p1_T(x_nhwc):
    N, H, W, C = x_nhwc.shape
    Ho = (H - 1) // 2 + 1
    Wo = (W - 1) // 2 + 1
    xp = jnp.pad(x_nhwc, ((0, 0), (1, 1), (1, 1), (0, 0)))
    cols = []
    for ki in range(3):
        for kj in range(3):
            cols.append(xp[:, ki:ki + 2 * Ho - 1:2, kj:kj + 2 * Wo - 1:2, :])
    patches = jnp.stack(cols, axis=0)                       # (9, N, Ho, Wo, C)
    patches = jnp.transpose(patches, (0, 4, 1, 2, 3))       # (9, C, N, Ho, Wo)
    return patches.reshape(9 * C, N * Ho * Wo), (N, Ho, Wo)


# ----------------------------------------------------------------------------
# Full forward pass (mirrors _SimpleSegmentationModel.forward)
# ----------------------------------------------------------------------------
def segmentation_forward(x_nchw, params):
    N, C, H, W = x_nchw.shape
    # Cast to bf16 BEFORE the im2col: halves the materialized patch traffic and
    # removes the separate cast pass (MXU accumulation stays f32 in-kernel).
    x_nhwc = jnp.transpose(x_nchw, (0, 2, 3, 1)).astype(jnp.bfloat16)
    patches_t, (Nb, Ho, Wo) = _im2col_3x3_s2_p1_T(x_nhwc)

    Cf = params["bb_w"].shape[0]
    nc = params["cls_w"].shape[0]

    # PyTorch conv weight (Cout, Cin, kh, kw) -> (Cf, kh*kw*Cin) matching patch order
    wbb = params["bb_w"].transpose(0, 2, 3, 1).reshape(Cf, 9 * C).astype(jnp.bfloat16)
    bbb = params["bb_b"].reshape(Cf, 1).astype(jnp.float32)
    # Both 1x1 heads concatenated: channels [0:nc] = classifier, [nc:2nc] = aux.
    whd = jnp.concatenate([params["cls_w"], params["aux_w"]],
                          axis=0).reshape(2 * nc, Cf).astype(jnp.bfloat16)
    bhd = jnp.concatenate([params["cls_b"], params["aux_b"]],
                          axis=0).reshape(2 * nc, 1).astype(jnp.float32)

    logits_t = fused_backbone_heads(patches_t, wbb, bbb, whd, bhd)   # (2nc, N*Ho*Wo)

    # Free reshape to (2nc, N, Ho, Wo); the bilinear kernel handles the
    # channel<->batch permutation via its index_maps (no XLA transpose).
    logits_cnhw = logits_t.reshape(2 * nc, Nb, Ho, Wo)
    up = bilinear_upsample_to_nchw(logits_cnhw, H, W)                # (N, 2nc, H, W)

    return {"out": up[:, :nc], "aux": up[:, nc:]}


# ----------------------------------------------------------------------------
# Pure-JAX reference (for a numerical sanity check of the Pallas plumbing)
# ----------------------------------------------------------------------------
def _reference_forward(x_nchw, params):
    H, W = x_nchw.shape[-2:]
    feat = jax.lax.conv_general_dilated(
        x_nchw, params["bb_w"], window_strides=(2, 2), padding=((1, 1), (1, 1)),
        dimension_numbers=("NCHW", "OIHW", "NCHW"))
    feat = jax.nn.relu(feat + params["bb_b"][None, :, None, None])

    def head(wc, bc):
        logits = jnp.einsum("ncHW,kc->nkHW", feat, wc.reshape(wc.shape[0], -1))
        logits = logits + bc[None, :, None, None]
        wh = jnp.asarray(_bilinear_matrix(H, logits.shape[2]))
        ww = jnp.asarray(_bilinear_matrix(W, logits.shape[3]))
        return jnp.einsum("hH,nkHW,wW->nkhw", wh, logits, ww)

    return {"out": head(params["cls_w"], params["cls_b"]),
            "aux": head(params["aux_w"], params["aux_b"])}


# ----------------------------------------------------------------------------
# Main
# ----------------------------------------------------------------------------
if __name__ == "__main__":
    key = jax.random.PRNGKey(0)
    k_x, k1, k2, k3, k4, k5, k6 = jax.random.split(key, 7)

    N, Cin, H, W = 2, 3, 16, 16
    Cf, NUM_CLASSES = 8, 4

    x = jax.random.normal(k_x, (N, Cin, H, W), dtype=jnp.float32)
    params = {
        "bb_w": 0.1 * jax.random.normal(k1, (Cf, Cin, 3, 3), dtype=jnp.float32),
        "bb_b": 0.1 * jax.random.normal(k2, (Cf,), dtype=jnp.float32),
        "cls_w": 0.1 * jax.random.normal(k3, (NUM_CLASSES, Cf, 1, 1), dtype=jnp.float32),
        "cls_b": 0.1 * jax.random.normal(k4, (NUM_CLASSES,), dtype=jnp.float32),
        "aux_w": 0.1 * jax.random.normal(k5, (NUM_CLASSES, Cf, 1, 1), dtype=jnp.float32),
        "aux_b": 0.1 * jax.random.normal(k6, (NUM_CLASSES,), dtype=jnp.float32),
    }

    out = jax.jit(segmentation_forward)(x, params)
    jax.block_until_ready(out)
    assert out["out"].shape == (N, NUM_CLASSES, H, W)
    assert out["aux"].shape == (N, NUM_CLASSES, H, W)

    ref = jax.jit(_reference_forward)(x, params)
    jax.block_until_ready(ref)
    for k in ("out", "aux"):
        assert np.allclose(np.asarray(out[k]), np.asarray(ref[k]),
                           atol=5e-2, rtol=5e-2), f"mismatch in result['{k}']"

    print("KERNEL_OK")
</pallas_src>

<mosaic_0001>
module attributes {stable_mosaic.version = 11 : i64} {
  func.func @_fused_backbone_heads_kernel(%arg0: i32, %arg1: memref<27x128xbf16, #tpu.memory_space<vmem>>, %arg2: memref<8x27xbf16, #tpu.memory_space<vmem>>, %arg3: memref<8x1xf32, #tpu.memory_space<vmem>>, %arg4: memref<8x8xbf16, #tpu.memory_space<vmem>>, %arg5: memref<8x1xf32, #tpu.memory_space<vmem>>, %arg6: memref<8x128xf32, #tpu.memory_space<vmem>>) attributes {dimension_semantics = [#tpu.dimension_semantics<parallel>], iteration_bounds = array<i64: 1>, scalar_prefetch = 0 : i64, scratch_operands = 0 : i64, tpu.core_type = #tpu.core_type<tc>, window_params = [{transform_indices = @transform_0, window_bounds = array<i64: 27, 128>}, {pipeline_mode = #tpu.pipeline_mode<synchronous>, transform_indices = @transform_1, window_bounds = array<i64: 8, 27>}, {pipeline_mode = #tpu.pipeline_mode<synchronous>, transform_indices = @transform_2, window_bounds = array<i64: 8, 1>}, {pipeline_mode = #tpu.pipeline_mode<synchronous>, transform_indices = @transform_3, window_bounds = array<i64: 8, 8>}, {pipeline_mode = #tpu.pipeline_mode<synchronous>, transform_indices = @transform_4, window_bounds = array<i64: 8, 1>}, {transform_indices = @transform_5, window_bounds = array<i64: 8, 128>}]} {
    %c0 = arith.constant 0 : index
    %c0_0 = arith.constant 0 : index
    %0 = vector.load %arg2[%c0, %c0_0] : memref<8x27xbf16, #tpu.memory_space<vmem>>, vector<8x27xbf16>
    %c0_1 = arith.constant 0 : index
    %c0_2 = arith.constant 0 : index
    %1 = vector.load %arg1[%c0_1, %c0_2] : memref<27x128xbf16, #tpu.memory_space<vmem>>, vector<27x128xbf16>
    %cst = arith.constant dense<0.000000e+00> : vector<8x128xf32>
    %2 = tpu.matmul %0, %1, %cst {dimension_numbers = #tpu.dot_dimension_numbers<[1], [0], [0], [1], [0, 0, 1, 1], [], []>} : vector<8x27xbf16>, vector<27x128xbf16>, vector<8x128xf32> -> vector<8x128xf32>
    %c0_3 = arith.constant 0 : index
    %c0_4 = arith.constant 0 : index
    %3 = vector.load %arg3[%c0_3, %c0_4] : memref<8x1xf32, #tpu.memory_space<vmem>>, vector<8x1xf32>
    %4 = vector.broadcast %3 : vector<8x1xf32> to vector<8x128xf32>
    %5 = arith.addf %2, %4 : vector<8x128xf32>
    %cst_5 = arith.constant 0.000000e+00 : f32
    %6 = vector.broadcast %cst_5 : f32 to vector<8x128xf32>
    %7 = arith.maximumf %5, %6 : vector<8x128xf32>
    %c0_6 = arith.constant 0 : index
    %c0_7 = arith.constant 0 : index
    %8 = vector.load %arg4[%c0_6, %c0_7] : memref<8x8xbf16, #tpu.memory_space<vmem>>, vector<8x8xbf16>
    %9 = arith.truncf %7 : vector<8x128xf32> to vector<8x128xbf16>
    %cst_8 = arith.constant dense<0.000000e+00> : vector<8x128xf32>
    %10 = tpu.matmul %8, %9, %cst_8 {dimension_numbers = #tpu.dot_dimension_numbers<[1], [0], [0], [1], [0, 0, 1, 1], [], []>} : vector<8x8xbf16>, vector<8x128xbf16>, vector<8x128xf32> -> vector<8x128xf32>
    %c0_9 = arith.constant 0 : index
    %c0_10 = arith.constant 0 : index
    %11 = vector.load %arg5[%c0_9, %c0_10] : memref<8x1xf32, #tpu.memory_space<vmem>>, vector<8x1xf32>
    %12 = vector.broadcast %11 : vector<8x1xf32> to vector<8x128xf32>
    %13 = arith.addf %10, %12 : vector<8x128xf32>
    %c0_11 = arith.constant 0 : index
    %c0_12 = arith.constant 0 : index
    %14 = vector.load %arg6[%c0_11, %c0_12] : memref<8x128xf32, #tpu.memory_space<vmem>>, vector<8x128xf32>
    tpu.vector_store %arg6[%c0_11, %c0_12], %13 {strides = array<i32>} : memref<8x128xf32, #tpu.memory_space<vmem>>, vector<8x128xf32>,
    return
  }
  func.func @transform_0(%arg0: i32) -> (i32, i32) {
    %c0_i32 = arith.constant 0 : i32
    %c0_i32_0 = arith.constant 0 : i32
    return %c0_i32, %arg0 : i32, i32
  }
  func.func @transform_1(%arg0: i32) -> (i32, i32) {
    %c0_i32 = arith.constant 0 : i32
    %c0_i32_0 = arith.constant 0 : i32
    %c0_i32_1 = arith.constant 0 : i32
    return %c0_i32, %c0_i32_0 : i32, i32
  }
  func.func @transform_2(%arg0: i32) -> (i32, i32) {
    %c0_i32 = arith.constant 0 : i32
    %c0_i32_0 = arith.constant 0 : i32
    %c0_i32_1 = arith.constant 0 : i32
    return %c0_i32, %c0_i32_0 : i32, i32
  }
  func.func @transform_3(%arg0: i32) -> (i32, i32) {
    %c0_i32 = arith.constant 0 : i32
    %c0_i32_0 = arith.constant 0 : i32
    %c0_i32_1 = arith.constant 0 : i32
    return %c0_i32, %c0_i32_0 : i32, i32
  }
  func.func @transform_4(%arg0: i32) -> (i32, i32) {
    %c0_i32 = arith.constant 0 : i32
    %c0_i32_0 = arith.constant 0 : i32
    %c0_i32_1 = arith.constant 0 : i32
    return %c0_i32, %c0_i32_0 : i32, i32
  }
  func.func @transform_5(%arg0: i32) -> (i32, i32) {
    %c0_i32 = arith.constant 0 : i32
    %c0_i32_0 = arith.constant 0 : i32
    return %c0_i32, %arg0 : i32, i32
  }
}

module attributes {stable_mosaic.version = 11 : i64} {
  func.func @_bilinear_kernel(%arg0: i32, %arg1: i32, %arg2: memref<8x1x8x8xf32, #tpu.memory_space<vmem>>, %arg3: memref<16x8xf32, #tpu.memory_space<vmem>>, %arg4: memref<8x16xf32, #tpu.memory_space<vmem>>, %arg5: memref<1x8x16x16xf32, #tpu.memory_space<vmem>>) attributes {dimension_semantics = [#tpu.dimension_semantics<parallel>, #tpu.dimension_semantics<parallel>], iteration_bounds = array<i64: 2, 1>, scalar_prefetch = 0 : i64, scratch_operands = 0 : i64, tpu.core_type = #tpu.core_type<tc>, window_params = [{transform_indices = @transform_0, window_bounds = array<i64: 8, 1, 8, 8>}, {pipeline_mode = #tpu.pipeline_mode<synchronous>, transform_indices = @transform_1, window_bounds = array<i64: 16, 8>}, {pipeline_mode = #tpu.pipeline_mode<synchronous>, transform_indices = @transform_2, window_bounds = array<i64: 8, 16>}, {transform_indices = @transform_3, window_bounds = array<i64: 1, 8, 16, 16>}]} {
    %c0 = arith.constant 0 : index
    %c0_0 = arith.constant 0 : index
    %c0_1 = arith.constant 0 : index
    %c0_2 = arith.constant 0 : index
    %0 = vector.load %arg2[%c0, %c0_0, %c0_1, %c0_2] : memref<8x1x8x8xf32, #tpu.memory_space<vmem>>, vector<8x1x8x8xf32>
    %1 = vector.shape_cast %0 : vector<8x1x8x8xf32> to vector<8x8x8xf32>
    %2 = vector.shape_cast %1 : vector<8x8x8xf32> to vector<64x8xf32>
    %c0_3 = arith.constant 0 : index
    %c0_4 = arith.constant 0 : index
    %3 = vector.load %arg4[%c0_3, %c0_4] : memref<8x16xf32, #tpu.memory_space<vmem>>, vector<8x16xf32>
    %cst = arith.constant dense<0.000000e+00> : vector<64x16xf32>
    %4 = tpu.matmul %2, %3, %cst {dimension_numbers = #tpu.dot_dimension_numbers<[1], [0], [0], [1], [0, 0, 1, 1], [], []>} : vector<64x8xf32>, vector<8x16xf32>, vector<64x16xf32> -> vector<64x16xf32>
    %5 = vector.shape_cast %4 : vector<64x16xf32> to vector<8x8x16xf32>
    %c0_5 = arith.constant 0 : index
    %c0_6 = arith.constant 0 : index
    %6 = vector.load %arg3[%c0_5, %c0_6] : memref<16x8xf32, #tpu.memory_space<vmem>>, vector<16x8xf32>
    %7 = vector.extract_strided_slice %5 {offsets = [0, 0, 0], sizes = [1, 8, 16], strides = [1, 1, 1]} : vector<8x8x16xf32> to vector<1x8x16xf32>
    %8 = vector.shape_cast %7 : vector<1x8x16xf32> to vector<8x16xf32>
    %cst_7 = arith.constant dense<0.000000e+00> : vector<16x16xf32>
    %9 = tpu.matmul %6, %8, %cst_7 {dimension_numbers = #tpu.dot_dimension_numbers<[1], [0], [0], [1], [0, 0, 1, 1], [], []>} : vector<16x8xf32>, vector<8x16xf32>, vector<16x16xf32> -> vector<16x16xf32>
    %10 = vector.extract_strided_slice %5 {offsets = [1, 0, 0], sizes = [1, 8, 16], strides = [1, 1, 1]} : vector<8x8x16xf32> to vector<1x8x16xf32>
    %11 = vector.shape_cast %10 : vector<1x8x16xf32> to vector<8x16xf32>
    %cst_8 = arith.constant dense<0.000000e+00> : vector<16x16xf32>
    %12 = tpu.matmul %6, %11, %cst_8 {dimension_numbers = #tpu.dot_dimension_numbers<[1], [0], [0], [1], [0, 0, 1, 1], [], []>} : vector<16x8xf32>, vector<8x16xf32>, vector<16x16xf32> -> vector<16x16xf32>
    %13 = vector.extract_strided_slice %5 {offsets = [2, 0, 0], sizes = [1, 8, 16], strides = [1, 1, 1]} : vector<8x8x16xf32> to vector<1x8x16xf32>
    %14 = vector.shape_cast %13 : vector<1x8x16xf32> to vector<8x16xf32>
    %cst_9 = arith.constant dense<0.000000e+00> : vector<16x16xf32>
    %15 = tpu.matmul %6, %14, %cst_9 {dimension_numbers = #tpu.dot_dimension_numbers<[1], [0], [0], [1], [0, 0, 1, 1], [], []>} : vector<16x8xf32>, vector<8x16xf32>, vector<16x16xf32> -> vector<16x16xf32>
    %16 = vector.extract_strided_slice %5 {offsets = [3, 0, 0], sizes = [1, 8, 16], strides = [1, 1, 1]} : vector<8x8x16xf32> to vector<1x8x16xf32>
    %17 = vector.shape_cast %16 : vector<1x8x16xf32> to vector<8x16xf32>
    %cst_10 = arith.constant dense<0.000000e+00> : vector<16x16xf32>
    %18 = tpu.matmul %6, %17, %cst_10 {dimension_numbers = #tpu.dot_dimension_numbers<[1], [0], [0], [1], [0, 0, 1, 1], [], []>} : vector<16x8xf32>, vector<8x16xf32>, vector<16x16xf32> -> vector<16x16xf32>
    %19 = vector.extract_strided_slice %5 {offsets = [4, 0, 0], sizes = [1, 8, 16], strides = [1, 1, 1]} : vector<8x8x16xf32> to vector<1x8x16xf32>
    %20 = vector.shape_cast %19 : vector<1x8x16xf32> to vector<8x16xf32>
    %cst_11 = arith.constant dense<0.000000e+00> : vector<16x16xf32>
    %21 = tpu.matmul %6, %20, %cst_11 {dimension_numbers = #tpu.dot_dimension_numbers<[1], [0], [0], [1], [0, 0, 1, 1], [], []>} : vector<16x8xf32>, vector<8x16xf32>, vector<16x16xf32> -> vector<16x16xf32>
    %22 = vector.extract_strided_slice %5 {offsets = [5, 0, 0], sizes = [1, 8, 16], strides = [1, 1, 1]} : vector<8x8x16xf32> to vector<1x8x16xf32>
    %23 = vector.shape_cast %22 : vector<1x8x16xf32> to vector<8x16xf32>
    %cst_12 = arith.constant dense<0.000000e+00> : vector<16x16xf32>
    %24 = tpu.matmul %6, %23, %cst_12 {dimension_numbers = #tpu.dot_dimension_numbers<[1], [0], [0], [1], [0, 0, 1, 1], [], []>} : vector<16x8xf32>, vector<8x16xf32>, vector<16x16xf32> -> vector<16x16xf32>
    %25 = vector.extract_strided_slice %5 {offsets = [6, 0, 0], sizes = [1, 8, 16], strides = [1, 1, 1]} : vector<8x8x16xf32> to vector<1x8x16xf32>
    %26 = vector.shape_cast %25 : vector<1x8x16xf32> to vector<8x16xf32>
    %cst_13 = arith.constant dense<0.000000e+00> : vector<16x16xf32>
    %27 = tpu.matmul %6, %26, %cst_13 {dimension_numbers = #tpu.dot_dimension_numbers<[1], [0], [0], [1], [0, 0, 1, 1], [], []>} : vector<16x8xf32>, vector<8x16xf32>, vector<16x16xf32> -> vector<16x16xf32>
    %28 = vector.extract_strided_slice %5 {offsets = [7, 0, 0], sizes = [1, 8, 16], strides = [1, 1, 1]} : vector<8x8x16xf32> to vector<1x8x16xf32>
    %29 = vector.shape_cast %28 : vector<1x8x16xf32> to vector<8x16xf32>
    %cst_14 = arith.constant dense<0.000000e+00> : vector<16x16xf32>
    %30 = tpu.matmul %6, %29, %cst_14 {dimension_numbers = #tpu.dot_dimension_numbers<[1], [0], [0], [1], [0, 0, 1, 1], [], []>} : vector<16x8xf32>, vector<8x16xf32>, vector<16x16xf32> -> vector<16x16xf32>
    %31 = vector.shape_cast %9 : vector<16x16xf32> to vector<1x16x16xf32>
    %32 = vector.shape_cast %12 : vector<16x16xf32> to vector<1x16x16xf32>
    %33 = vector.shape_cast %15 : vector<16x16xf32> to vector<1x16x16xf32>
    %34 = vector.shape_cast %18 : vector<16x16xf32> to vector<1x16x16xf32>
    %35 = vector.shape_cast %21 : vector<16x16xf32> to vector<1x16x16xf32>
    %36 = vector.shape_cast %24 : vector<16x16xf32> to vector<1x16x16xf32>
    %37 = vector.shape_cast %27 : vector<16x16xf32> to vector<1x16x16xf32>
    %38 = vector.shape_cast %30 : vector<16x16xf32> to vector<1x16x16xf32>
    %39 = tpu.concatenate %31, %32, %33, %34, %35, %36, %37, %38 in 0 : vector<1x16x16xf32>, vector<1x16x16xf32>, vector<1x16x16xf32>, vector<1x16x16xf32>, vector<1x16x16xf32>, vector<1x16x16xf32>, vector<1x16x16xf32>, vector<1x16x16xf32> -> vector<8x16x16xf32>
    %40 = vector.shape_cast %39 : vector<8x16x16xf32> to vector<1x8x16x16xf32>
    %c0_15 = arith.constant 0 : index
    %c0_16 = arith.constant 0 : index
    %c0_17 = arith.constant 0 : index
    %c0_18 = arith.constant 0 : index
    %41 = vector.load %arg5[%c0_15, %c0_16, %c0_17, %c0_18] : memref<1x8x16x16xf32, #tpu.memory_space<vmem>>, vector<1x8x16x16xf32>
    tpu.vector_store %arg5[%c0_15, %c0_16, %c0_17, %c0_18], %40 {strides = array<i32>} : memref<1x8x16x16xf32, #tpu.memory_space<vmem>>, vector<1x8x16x16xf32>,
    return
  }
  func.func @transform_0(%arg0: i32, %arg1: i32) -> (i32, i32, i32, i32) {
    %c0_i32 = arith.constant 0 : i32
    %c0_i32_0 = arith.constant 0 : i32
    %c0_i32_1 = arith.constant 0 : i32
    return %arg1, %arg0, %c0_i32, %c0_i32_0 : i32, i32, i32, i32
  }
  func.func @transform_1(%arg0: i32, %arg1: i32) -> (i32, i32) {
    %c0_i32 = arith.constant 0 : i32
    %c0_i32_0 = arith.constant 0 : i32
    %c0_i32_1 = arith.constant 0 : i32
    return %c0_i32, %c0_i32_0 : i32, i32
  }
  func.func @transform_2(%arg0: i32, %arg1: i32) -> (i32, i32) {
    %c0_i32 = arith.constant 0 : i32
    %c0_i32_0 = arith.constant 0 : i32
    %c0_i32_1 = arith.constant 0 : i32
    return %c0_i32, %c0_i32_0 : i32, i32
  }
  func.func @transform_3(%arg0: i32, %arg1: i32) -> (i32, i32, i32, i32) {
    %c0_i32 = arith.constant 0 : i32
    %c0_i32_0 = arith.constant 0 : i32
    %c0_i32_1 = arith.constant 0 : i32
    return %arg0, %arg1, %c0_i32, %c0_i32_0 : i32, i32, i32, i32
  }
}

</mosaic_0001>

<llo_original>
// kernel: segmentation_forward.2
$region0: #{segmentation_forward.2}
  #allocation0 [shape = 'u32[]', space=smem, size = 0x4, offset = 0x4, fixed_abs, tag = 'smem constant byte address 0x4 - core index']
  #allocation1 [shape = 'u32[144,128]{1,0:T(1,128)}', space=vmem, size = 0x12000, scoped, tag = 'internal scratch']
  %s0 = inlined_call_operand.vmem [shape: bf16[27,128], index: 0, kind: input, shape index: {}]
  %s1 = inlined_call_operand.vmem [shape: bf16[8,27], index: 1, kind: input, shape index: {}]
  %s2 = inlined_call_operand.vmem [shape: f32[8,1], index: 2, kind: input, shape index: {}]
  %s3 = inlined_call_operand.vmem [shape: bf16[8,8], index: 3, kind: input, shape index: {}]
  %s4 = inlined_call_operand.vmem [shape: f32[8,1], index: 4, kind: input, shape index: {}]
  %s5 = inlined_call_operand.vmem [shape: f32[8,128], index: 5, kind: output, shape index: {}]
  %s6 = sld [smem:[#allocation0]]
  $region30: #{segmentation_forward.2} parent=0
    _
  %s8 = ssub.s32 1, %s6
  %s9 = scalar_select 0, %s8, %s6
  // Predicated region
  $region2: #{segmentation_forward.2} parent=0 // pred_check
    _
  $region3: #{segmentation_forward.2} parent=0 // pred_check_branch
    %11 = sbr.rel (0) target = $region5
  $region4: #{segmentation_forward.2} parent=0 // pred_region
    _
  $region5: #{segmentation_forward.2} parent=0 // pred_fallthru
    _
  // Predicated region
  $region6: #{segmentation_forward.2} parent=0 // pred_check
    _
  $region7: #{segmentation_forward.2} parent=0 // pred_check_branch
    %13 = sbr.rel (0) target = $region9
  $region8: #{segmentation_forward.2} parent=0 // pred_region
    _
  $region9: #{segmentation_forward.2} parent=0 // pred_fallthru
    _
  // Predicated region
  $region10: #{segmentation_forward.2} parent=0 // pred_check
    _
  $region11: #{segmentation_forward.2} parent=0 // pred_check_branch
    %15 = sbr.rel (0) target = $region13
  $region12: #{segmentation_forward.2} parent=0 // pred_region
    _
  $region13: #{segmentation_forward.2} parent=0 // pred_fallthru
    _
  // Predicated region
  $region14: #{segmentation_forward.2} parent=0 // pred_check
    _
  $region15: #{segmentation_forward.2} parent=0 // pred_check_branch
    %17 = sbr.rel (0) target = $region17
  $region16: #{segmentation_forward.2} parent=0 // pred_region
    _
  $region17: #{segmentation_forward.2} parent=0 // pred_fallthru
    _
  // Predicated region
  $region18: #{segmentation_forward.2} parent=0 // pred_check
    _
  $region19: #{segmentation_forward.2} parent=0 // pred_check_branch
    %19 = sbr.rel (0) target = $region21
  $region20: #{segmentation_forward.2} parent=0 // pred_region
    _
  $region21: #{segmentation_forward.2} parent=0 // pred_fallthru
    _
  %v21 = vld [vmem:[%s1] sm:$0xf]
  %v22 = vld [vmem:[%s0] sm:$0xf]
  %v23 = vld [vmem:[%s0 + $0x4] sm:$0xf]
  %v24 = vld [vmem:[%s0 + $0x8] sm:$0xf]
  %v25 = vld [vmem:[%s0 + $0xc] sm:$0x3]
  %v26 = vld [vmem:[%s2] sm:$0xff]
  %28 = vset.pattern.permute.xlu0 0
  %29 = vperm.xlu0 %28, %v26
  %v30 = vpop.permute.xlu0 %29
  %v36 = vunpack.c.l.b16 %v22
  %v37 = vunpack.c.l.b16 %v23
  %v38 = vunpack.c.l.b16 %v24
  %v39 = vunpack.c.l.b16 %v25
  %v40 = vpack.c.b16 %v37, %v36
  %v41 = vpack.c.b16 %v39, %v38
  %vm43 = vcmask 220160
  %v45 = vsel %vm43, %v21, 0
  %vm47 = vcmask 1044480
  %vm48 = vcmask 1045504
  %v49 = vsel %vm47, 4294967295, 65535
  %v50 = vsel %vm48, %v49, 0
  %v52 = vand.u32 %v41, %v50
  %54 = vmatprep.subr.bf16.mxu0 0
  %55 = vmatpush1.bf16.msra.mxu0 0
  %56 = vmatprep.subr.bf16.mxu0 0
  %57 = vmatpush1.bf16.msra.mxu0 0
  %58 = vmatprep.subr.bf16.mxu0 0
  %59 = vmatpush1.bf16.msra.mxu0 0
  %60 = vmatprep.subr.bf16.mxu0 0
  %61 = vmatpush1.bf16.msra.mxu0 0
  %62 = vmatprep.subr.bf16.mxu0 0
  %63 = vmatpush1.bf16.msra.mxu0 0
  %64 = vmatprep.subr.bf16.mxu0 0
  %65 = vmatpush1.bf16.msra.mxu0 0
  %66 = vmatprep.subr.bf16.mxu0 0
  %67 = vmatpush1.bf16.msra.mxu0 %v52
  %68 = vmatprep.subr.bf16.mxu0 0
  %69 = vmatpush1.bf16.msra.mxu0 %v40
  %70 = vmatprep.subr.bf16.mxu0 0
  %71 = vmatpush2.bf16.msra.mxu0 0
  %72 = vmatprep.subr.bf16.mxu0 0
  %73 = vmatpush2.bf16.msra.mxu0 0
  %74 = vmatprep.subr.bf16.mxu0 0
  %75 = vmatpush2.bf16.msra.mxu0 0
  %76 = vmatprep.subr.bf16.mxu0 0
  %77 = vmatpush2.bf16.msra.mxu0 0
  %78 = vmatprep.subr.bf16.mxu0 0
  %79 = vmatpush2.bf16.msra.mxu0 0
  %80 = vmatprep.subr.bf16.mxu0 0
  %81 = vmatpush2.bf16.msra.mxu0 0
  %82 = vmatprep.subr.bf16.mxu0 0
  %83 = vmatpush2.bf16.msra.mxu0 0
  %84 = vmatprep.subr.bf16.mxu0 0
  %85 = vmatpush2.bf16.msra.mxu0 0
  %86 = vmatprep.mubr.bf16.mxu0 0
  %87 = vmatmul.mubr.bf16.gmra.mxu0 %v45
  %v88 = vpop.f32.mrf.mxu0
  %v89 = vadd.f32 %v30, %v88
  %v90 = vpop.f32.mrf.mxu0
  %v91 = vpop.f32.mrf.mxu0
  %v92 = vpop.f32.mrf.mxu0
  %93 = vdwg.mxu0
  %v94 = vmax.f32 %v89, 0.0
  %v95 = vld [vmem:[%s3] sm:$0xf]
  %v96 = vpack.c.bf16 %v94, %v94
  %v97 = vld [vmem:[%s4] sm:$0xff]
  %99 = vset.pattern.permute.xlu0 0
  %100 = vperm.xlu0 %99, %v97
  %v101 = vpop.permute.xlu0 %100
  %vm103 = vcmask 64512
  %v105 = vsel %vm103, %v95, 0
  %vm107 = vcmask 1043456
  %v109 = vsel %vm107, %v96, 0
  %111 = vmatprep.subr.bf16.mxu0 0
  %112 = vmatpush1.bf16.msra.mxu0 0
  %113 = vmatprep.subr.bf16.mxu0 0
  %114 = vmatpush1.bf16.msra.mxu0 0
  %115 = vmatprep.subr.bf16.mxu0 0
  %116 = vmatpush1.bf16.msra.mxu0 0
  %117 = vmatprep.subr.bf16.mxu0 0
  %118 = vmatpush1.bf16.msra.mxu0 0
  %119 = vmatprep.subr.bf16.mxu0 0
  %120 = vmatpush1.bf16.msra.mxu0 0
  %121 = vmatprep.subr.bf16.mxu0 0
  %122 = vmatpush1.bf16.msra.mxu0 0
  %123 = vmatprep.subr.bf16.mxu0 0
  %124 = vmatpush1.bf16.msra.mxu0 0
  %125 = vmatprep.subr.bf16.mxu0 0
  %126 = vmatpush1.bf16.msra.mxu0 %v109
  %127 = vmatprep.subr.bf16.mxu0 0
  %128 = vmatpush2.bf16.msra.mxu0 0
  %129 = vmatprep.subr.bf16.mxu0 0
  %130 = vmatpush2.bf16.msra.mxu0 0
  %131 = vmatprep.subr.bf16.mxu0 0
  %132 = vmatpush2.bf16.msra.mxu0 0
  %133 = vmatprep.subr.bf16.mxu0 0
  %134 = vmatpush2.bf16.msra.mxu0 0
  %135 = vmatprep.subr.bf16.mxu0 0
  %136 = vmatpush2.bf16.msra.mxu0 0
  %137 = vmatprep.subr.bf16.mxu0 0
  %138 = vmatpush2.bf16.msra.mxu0 0
  %139 = vmatprep.subr.bf16.mxu0 0
  %140 = vmatpush2.bf16.msra.mxu0 0
  %141 = vmatprep.subr.bf16.mxu0 0
  %142 = vmatpush2.bf16.msra.mxu0 0
  %143 = vmatprep.mubr.bf16.mxu0 0
  %144 = vmatmul.mubr.bf16.gmra.mxu0 %v105
  %v145 = vpop.f32.mrf.mxu0
  %v146 = vadd.f32 %v101, %v145
  %v147 = vpop.f32.mrf.mxu0
  %v148 = vpop.f32.mrf.mxu0
  %v149 = vpop.f32.mrf.mxu0
  %150 = vdwg.mxu0
  %151 = vst [vmem:[%s5] sm:$0xff] %v146
  // Predicated region
  $region22: #{segmentation_forward.2} parent=0 // pred_check
    _
  $region23: #{segmentation_forward.2} parent=0 // pred_check_branch
    %153 = sbr.rel (0) target = $region25
  $region24: #{segmentation_forward.2} parent=0 // pred_region
    _
  $region25: #{segmentation_forward.2} parent=0 // pred_fallthru
    _
  // Predicated region
  $region26: #{segmentation_forward.2} parent=0 // pred_check
    _
  $region27: #{segmentation_forward.2} parent=0 // pred_check_branch
    %155 = sbr.rel (0) target = $region29
  $region28: #{segmentation_forward.2} parent=0 // pred_region
    _
  $region29: #{segmentation_forward.2} parent=0 // pred_fallthru
    _

// kernel: segmentation_forward.3
$region0: #{segmentation_forward.3}
  #allocation0 [shape = 'u32[]', space=smem, size = 0x4, offset = 0x4, fixed_abs, tag = 'smem constant byte address 0x4 - core index']
  #allocation1 [shape = 'u32[144,128]{1,0:T(1,128)}', space=vmem, size = 0x12000, scoped, tag = 'internal scratch']
  %s0 = inlined_call_operand.vmem [shape: f32[8,2,8,8], index: 0, kind: input, shape index: {}]
  %s1 = inlined_call_operand.vmem [shape: f32[16,8], index: 1, kind: input, shape index: {}]
  %s2 = inlined_call_operand.vmem [shape: f32[8,16], index: 2, kind: input, shape index: {}]
  %s3 = inlined_call_operand.vmem [shape: f32[2,8,16,16], index: 3, kind: output, shape index: {}]
  %s4 = sld [smem:[#allocation0]]
  $region83: #{segmentation_forward.3} parent=0
    _
  %s6 = ssub.s32 1, %s4
  %s7 = scalar_select 0, %s6, %s4
  $region1: #{segmentation_forward.3} parent=0
    #allocation2 [shape = 'u8[65536]{0}', space=vmem, size = 0x10000, scoped, tag = 'input window, operand 0']
    loop: start=0, step=1, limit=4
    $region2: #{segmentation_forward.3} parent=1 // loop_pre_header
      _
    $region3: #{segmentation_forward.3} parent=1 // loop_header
      %s9 = sphi 0, %s13
      %p10 = scmp.ge.s32.totalorder %s9, 4
      %s16 = sphi 0, %s28
      %s17 = sphi 0, %s24
      %s18 = sphi 0, %s16
      %s19 = sphi 0, %s17
      %s20 = sphi 0, %s18
      %s21 = sphi 0, %s19
      %s33 = sphi 0, %s35
      %s36 = sphi 0, %s33
      %s37 = sphi 0, %s36
      %s53 = sphi 0, %s37
      %s57 = sphi 0, %s57
      %s59 = sphi 0, %s57
      %s60 = sphi 0, %s59
      %s74 = sphi 0, %s60
      %s78 = sphi 0, %s78
      %s80 = sphi 0, %s78
      %s81 = sphi 0, %s80
      %s95 = sphi 0, %s81
      %s103 = sphi 0, %s105
      %s106 = sphi 0, %s103
      %s107 = sphi 0, %s106
      %s123 = sphi 0, %s107
    $region4: #{segmentation_forward.3} parent=1 // loop_header_branch
      %12 = sbr.rel (%p10) target = $region8
    $region5: #{segmentation_forward.3} parent=1 // loop_body
      %s14 = ssub.s32 %s9, 1
      %s15 = ssub.s32 %s9, 2
      %s22 = sadd.s32 1, %s17
      %p23 = scmp.ge.s32.totalorder %s22, 1
      %s24 = scalar_select %p23, 0, %s22
      %s25 = sadd.s32 1, %s16
      %s26 = scalar_select %p23, %s25, %s16
      %p27 = scmp.ge.s32.totalorder %s26, 2
      %s28 = scalar_select %p27, 0, %s26
      %s29 = ssub.s32 %s17, %s24
      %s30 = ssub.s32 %s16, %s28
      %s31 = sor.u32 %s29, %s30
      %p32 = scmp.eq.s32.totalorder %s31, 0
      %s34 = sadd.s32 %s33, 1
      %s35 = scalar_select %p32, %s33, %s34
      %p38 = pneg %p32
      %p39 = scmp.eq.s32.totalorder %s9, 1
      %p40 = por %p38, %p39
      %p41 = scmp.ne.s32.totalorder %s33, %s36
      %p42 = scmp.eq.s32.totalorder %s9, 0
      %p43 = por %p41, %p42
      %p44 = scmp.ne.s32.totalorder %s33, %s36
      %p45 = scmp.eq.s32.totalorder %s14, 1
      %p46 = por %p44, %p45
      %p47 = scmp.ne.s32.totalorder %s36, %s37
      %p48 = scmp.eq.s32.totalorder %s14, 0
      %p49 = por %p47, %p48
      %p50 = scmp.ne.s32.totalorder %s36, %s37
      %p51 = scmp.eq.s32.totalorder %s15, 1
      %p52 = por %p50, %p51
      %p54 = scmp.ne.s32.totalorder %s37, %s53
      %p55 = scmp.eq.s32.totalorder %s15, 0
      %p56 = por %p54, %p55
      %s58 = sadd.s32 %s57, 1
      %p61 = scmp.eq.s32.totalorder %s9, 1
      %p62 = scmp.ne.s32.totalorder %s57, %s59
      %p63 = scmp.eq.s32.totalorder %s9, 0
      %p64 = por %p62, %p63
      %p65 = scmp.ne.s32.totalorder %s57, %s59
      %p66 = scmp.eq.s32.totalorder %s14, 1
      %p67 = por %p65, %p66
      %p68 = scmp.ne.s32.totalorder %s59, %s60
      %p69 = scmp.eq.s32.totalorder %s14, 0
      %p70 = por %p68, %p69
      %p71 = scmp.ne.s32.totalorder %s59, %s60
      %p72 = scmp.eq.s32.totalorder %s15, 1
      %p73 = por %p71, %p72
      %p75 = scmp.ne.s32.totalorder %s60, %s74
      %p76 = scmp.eq.s32.totalorder %s15, 0
      %p77 = por %p75, %p76
      %s79 = sadd.s32 %s78, 1
      %p82 = scmp.eq.s32.totalorder %s9, 1
      %p83 = scmp.ne.s32.totalorder %s78, %s80
      %p84 = scmp.eq.s32.totalorder %s9, 0
      %p85 = por %p83, %p84
      %p86 = scmp.ne.s32.totalorder %s78, %s80
      %p87 = scmp.eq.s32.totalorder %s14, 1
      %p88 = por %p86, %p87
      %p89 = scmp.ne.s32.totalorder %s80, %s81
      %p90 = scmp.eq.s32.totalorder %s14, 0
      %p91 = por %p89, %p90
      %p92 = scmp.ne.s32.totalorder %s80, %s81
      %p93 = scmp.eq.s32.totalorder %s15, 1
      %p94 = por %p92, %p93
      %p96 = scmp.ne.s32.totalorder %s81, %s95
      %p97 = scmp.eq.s32.totalorder %s15, 0
      %p98 = por %p96, %p97
      %s99 = ssub.s32 %s16, %s28
      %s100 = ssub.s32 %s17, %s24
      %s101 = sor.u32 %s99, %s100
      %p102 = scmp.eq.s32.totalorder %s101, 0
      %s104 = sadd.s32 %s103, 1
      %s105 = scalar_select %p102, %s103, %s104
      %p108 = pneg %p102
      %p109 = scmp.eq.s32.totalorder %s9, 1
      %p110 = por %p108, %p109
      %p111 = scmp.ne.s32.totalorder %s103, %s106
      %p112 = scmp.eq.s32.totalorder %s9, 0
      %p113 = por %p111, %p112
      %p114 = scmp.ne.s32.totalorder %s103, %s106
      %p115 = scmp.eq.s32.totalorder %s14, 1
      %p116 = por %p114, %p115
      %p117 = scmp.ne.s32.totalorder %s106, %s107
      %p118 = scmp.eq.s32.totalorder %s14, 0
      %p119 = por %p117, %p118
      %p120 = scmp.ne.s32.totalorder %s106, %s107
      %p121 = scmp.eq.s32.totalorder %s15, 1
      %p122 = por %p120, %p121
      %p124 = scmp.ne.s32.totalorder %s107, %s123
      %p125 = scmp.eq.s32.totalorder %s15, 0
      %p126 = por %p124, %p125
      %p127 = scmp.le.s32.totalorder 1, %s9
      %p128 = scmp.lt.s32.totalorder %s9, 3
      %p129 = pnand %p127, %p128
      %p130 = pneg %p129
      // Predicated region
      $region9: #{segmentation_forward.3} parent=5 // pred_check
        _
      $region10: #{segmentation_forward.3} parent=5 // pred_check_branch
        %132 = sbr.rel (%p129) target = $region12
      $region11: #{segmentation_forward.3} parent=5 // pred_region
        %s133 = ssub.s32 %s9, 1
        // Predicated region
        $region13: #{segmentation_forward.3} parent=11 // pred_check
          %p134 = pneg %p70
        $region14: #{segmentation_forward.3} parent=11 // pred_check_branch
          %136 = sbr.rel (%p134) target = $region16
        $region15: #{segmentation_forward.3} parent=11 // pred_region
          _
        $region16: #{segmentation_forward.3} parent=11 // pred_fallthru
          _
        // Predicated region
        $region17: #{segmentation_forward.3} parent=11 // pred_check
          %p137 = pneg %p91
        $region18: #{segmentation_forward.3} parent=11 // pred_check_branch
          %139 = sbr.rel (%p137) target = $region20
        $region19: #{segmentation_forward.3} parent=11 // pred_region
          _
        $region20: #{segmentation_forward.3} parent=11 // pred_fallthru
          _
      $region12: #{segmentation_forward.3} parent=5 // pred_fallthru
        _
      %p140 = scmp.lt.s32.totalorder %s9, 2
      // Predicated region
      $region21: #{segmentation_forward.3} parent=5 // pred_check
        %p141 = pneg %p140
      $region22: #{segmentation_forward.3} parent=5 // pred_check_branch
        %143 = sbr.rel (%p141) target = $region24
      $region23: #{segmentation_forward.3} parent=5 // pred_region
        // Predicated region
        $region25: #{segmentation_forward.3} parent=23 // pred_check
          %p144 = pneg %p43
        $region26: #{segmentation_forward.3} parent=23 // pred_check_branch
          %146 = sbr.rel (%p144) target = $region28
        $region27: #{segmentation_forward.3} parent=23 // pred_region
          %s147 = sand.u32 %s33, 1
          %s148 = sand.u32 %s33, 1
          %s149 = smul.addr %s148, 64
          %s150 = scalar_lea.vmem [#allocation2], %s149
          %s151 = smul.u32 8, %s17
          %s152 = smul.addr %s151, 2
          %s153 = sadd.s32 %s16, %s152
          %s154 = smul.addr %s153, 8
          %s155 = scalar_lea.vmem %s0, %s154
          // Predicated region
          $region29: #{segmentation_forward.3} parent=27 // pred_check
            _
          $region30: #{segmentation_forward.3} parent=27 // pred_check_branch
            %157 = sbr.rel (0) target = $region32
          $region31: #{segmentation_forward.3} parent=27 // pred_region
            // Predicated region
            $region33: #{segmentation_forward.3} parent=31 // pred_check
              _
            $region34: #{segmentation_forward.3} parent=31 // pred_check_branch
              %159 = sbr.rel (0) target = $region36
            $region35: #{segmentation_forward.3} parent=31 // pred_region
              // Predicated region
              $region48: #{segmentation_forward.3} parent=35 // pred_check
                _
              $region49: #{segmentation_forward.3} parent=35 // pred_check_branch
                %189 = sbr.rel (0) target = $region51
              $region50: #{segmentation_forward.3} parent=35 // pred_region
                loop: start=0, step=1, limit=1
                $region52: #{segmentation_forward.3} parent=50 // loop_pre_header
                  _
                $region53: #{segmentation_forward.3} parent=50 // loop_header
                  %s191 = sphi 0, %s195
                  %p192 = scmp.ge.s32.totalorder %s191, 1
                  %s196 = sphi %s155, %s155
                  %s197 = sphi %s150, %s150
                $region54: #{segmentation_forward.3} parent=50 // loop_header_branch
                  %194 = sbr.rel (%p192) target = $region58
                $region55: #{segmentation_forward.3} parent=50 // loop_body
                  %v198 = vld [vmem:[%s196] sm:$0xff]
                  %199 = vst [vmem:[%s197] sm:$0xff] %v198
                  %v200 = vld [vmem:[%s196 + $0x10] sm:$0xff]
                  %201 = vst [vmem:[%s197 + $0x8] sm:$0xff] %v200
                  %v202 = vld [vmem:[%s196 + $0x20] sm:$0xff]
                  %203 = vst [vmem:[%s197 + $0x10] sm:$0xff] %v202
                  %v204 = vld [vmem:[%s196 + $0x30] sm:$0xff]
                  %205 = vst [vmem:[%s197 + $0x18] sm:$0xff] %v204
                  %v206 = vld [vmem:[%s196 + $0x40] sm:$0xff]
                  %207 = vst [vmem:[%s197 + $0x20] sm:$0xff] %v206
                  %v208 = vld [vmem:[%s196 + $0x50] sm:$0xff]
                  %209 = vst [vmem:[%s197 + $0x28] sm:$0xff] %v208
                  %v210 = vld [vmem:[%s196 + $0x60] sm:$0xff]
                  %211 = vst [vmem:[%s197 + $0x30] sm:$0xff] %v210
                  %v212 = vld [vmem:[%s196 + $0x70] sm:$0xff]
                  %213 = vst [vmem:[%s197 + $0x38] sm:$0xff] %v212
                $region56: #{segmentation_forward.3} parent=50 // loop_footer
                  %s195 = sadd.s32 1, %s191
                $region57: #{segmentation_forward.3} parent=50 // loop_footer_branch
                  %190 = sbr.rel target = $region53
                $region58: #{segmentation_forward.3} parent=50 // loop_exit
                  _
              $region51: #{segmentation_forward.3} parent=35 // pred_fallthru
                _
              // Predicated region
              $region59: #{segmentation_forward.3} parent=35 // pred_check
                _
              $region60: #{segmentation_forward.3} parent=35 // pred_check_branch
                %215 = sbr.rel target = $region62
              $region61: #{segmentation_forward.3} parent=35 // pred_region
                _
              $region62: #{segmentation_forward.3} parent=35 // pred_fallthru
                _
            $region36: #{segmentation_forward.3} parent=31 // pred_fallthru
              _
            // Predicated region
            $region37: #{segmentation_forward.3} parent=31 // pred_check
              _
            $region38: #{segmentation_forward.3} parent=31 // pred_check_branch
              %161 = sbr.rel target = $region40
            $region39: #{segmentation_forward.3} parent=31 // pred_region
              %s163 = ssub.s32 256, 1
              loop: start=0, step=1, limit=1
              $region41: #{segmentation_forward.3} parent=39 // loop_pre_header
                _
              $region42: #{segmentation_forward.3} parent=39 // loop_header
                %s165 = sphi 0, %s169
                %p166 = scmp.ge.s32.totalorder %s165, 1
                %s170 = sphi %s155, %s155
                %s171 = sphi %s150, %s150
              $region43: #{segmentation_forward.3} parent=39 // loop_header_branch
                %168 = sbr.rel (%p166) target = $region47
              $region44: #{segmentation_forward.3} parent=39 // loop_body
                %v172 = vld [vmem:[%s170] sm:%s163]
                %173 = vst [vmem:[%s171] sm:%s163] %v172
                %v174 = vld [vmem:[%s170 + $0x10] sm:%s163]
                %175 = vst [vmem:[%s171 + $0x8] sm:%s163] %v174
                %v176 = vld [vmem:[%s170 + $0x20] sm:%s163]
                %177 = vst [vmem:[%s171 + $0x10] sm:%s163] %v176
                %v178 = vld [vmem:[%s170 + $0x30] sm:%s163]
                %179 = vst [vmem:[%s171 + $0x18] sm:%s163] %v178
                %v180 = vld [vmem:[%s170 + $0x40] sm:%s163]
                %181 = vst [vmem:[%s171 + $0x20] sm:%s163] %v180
                %v182 = vld [vmem:[%s170 + $0x50] sm:%s163]
                %183 = vst [vmem:[%s171 + $0x28] sm:%s163] %v182
                %v184 = vld [vmem:[%s170 + $0x60] sm:%s163]
                %185 = vst [vmem:[%s171 + $0x30] sm:%s163] %v184
                %v186 = vld [vmem:[%s170 + $0x70] sm:%s163]
                %187 = vst [vmem:[%s171 + $0x38] sm:%s163] %v186
              $region45: #{segmentation_forward.3} parent=39 // loop_footer
                %s169 = sadd.s32 1, %s165
              $region46: #{segmentation_forward.3} parent=39 // loop_footer_branch
                %164 = sbr.rel target = $region42
              $region47: #{segmentation_forward.3} parent=39 // loop_exit
                _
            $region40: #{segmentation_forward.3} parent=31 // pred_fallthru
              _
          $region32: #{segmentation_forward.3} parent=27 // pred_fallthru
            _
          %216 = vnop
        $region28: #{segmentation_forward.3} parent=23 // pred_fallthru
          _
      $region24: #{segmentation_forward.3} parent=5 // pred_fallthru
        _
      %p217 = scmp.le.s32.totalorder 1, %s9
      %p218 = scmp.lt.s32.totalorder %s9, 3
      %p219 = pnand %p217, %p218
      %p220 = pneg %p219
      // Predicated region
      $region63: #{segmentation_forward.3} parent=5 // pred_check
        _
      $region64: #{segmentation_forward.3} parent=5 // pred_check_branch
        %222 = sbr.rel (%p219) target = $region66
      $region65: #{segmentation_forward.3} parent=5 // pred_region
        %s223 = ssub.s32 %s9, 1
        %s224 = sand.u32 %s36, 1
        %s225 = sand.u32 %s36, 1
        %s226 = smul.addr %s225, 64
        %s227 = scalar_lea.vmem [#allocation2], %s226
        // Predicated region
        $region67: #{segmentation_forward.3} parent=65 // pred_check
          %p228 = pneg %p49
        $region68: #{segmentation_forward.3} parent=65 // pred_check_branch
          %230 = sbr.rel (%p228) target = $region70
        $region69: #{segmentation_forward.3} parent=65 // pred_region
          _
        $region70: #{segmentation_forward.3} parent=65 // pred_fallthru
          _
        %s231 = sand.u32 %s36, 1
        %s232 = sand.u32 %s36, 1
        %s233 = smul.addr %s232, 64
        %s234 = scalar_lea.vmem [#allocation2], %s233
        %p235 = pneg %p49
        %p236 = pneg %p46
        %p237 = pneg %p70
        %p238 = pneg %p67
        %p239 = pneg %p91
        %p240 = pneg %p88
        %p241 = pneg %p119
        %p242 = pneg %p116
        %s243 = smul.u32 8, %s19
        %p244 = scmp.lt.s32.totalorder %s18, 1
        %s245 = scalar_select %p244, %s18, 1
        %p246 = scmp.lt.s32.totalorder %s243, 7
        %s247 = scalar_select %p246, %s243, 7
        %s248 = smul.addr %s247, 2
        %s249 = smul.addr %s245, 16
        %s250 = sadd.s32 %s248, %s249
        %s251 = smul.addr %s250, 8
        %s252 = scalar_lea.vmem %s3, %s251
        %s253 = smul.u32 8, %s19
        %s254 = smul.u32 8, %s19
        %p255 = scmp.lt.s32.totalorder %s18, 1
        %s256 = scalar_select %p255, %s18, 1
        %p257 = scmp.lt.s32.totalorder %s254, 7
        %s258 = scalar_select %p257, %s254, 7
        %s259 = smul.addr %s258, 2
        %s260 = smul.addr %s256, 16
        %s261 = sadd.s32 %s259, %s260
        %s262 = smul.addr %s261, 8
        %s263 = scalar_lea.vmem %s3, %s262
        %s264 = smul.u32 8, %s19
        %v265 = vld [vmem:[%s227] sm:$0xff]
        %v266 = vld [vmem:[%s227 + $0x8] sm:$0xff]
        %v267 = vld [vmem:[%s227 + $0x10] sm:$0xff]
        %v268 = vld [vmem:[%s227 + $0x18] sm:$0xff]
        %v269 = vld [vmem:[%s227 + $0x20] sm:$0xff]
        %v270 = vld [vmem:[%s227 + $0x28] sm:$0xff]
        %v271 = vld [vmem:[%s227 + $0x30] sm:$0xff]
        %v272 = vld [vmem:[%s227 + $0x38] sm:$0xff]
        %v273 = vld [vmem:[%s2] sm:$0xff]
        %vm274 = vcmask 64512
        %v276 = vsel %vm274, %v265, 0
        %v279 = vsel %vm274, %v266, 0
        %v282 = vsel %vm274, %v267, 0
        %v285 = vsel %vm274, %v268, 0
        %v288 = vsel %vm274, %v269, 0
        %v291 = vsel %vm274, %v270, 0
        %v294 = vsel %vm274, %v271, 0
        %v297 = vsel %vm274, %v272, 0
        %299 = vmatprep.subr.mxu0 0.0
        %300 = vmatpush1.msra.mxu0 0.0
        %301 = vmatprep.subr.mxu0 0.0
        %302 = vmatpush1.msra.mxu0 0.0
        %303 = vmatprep.subr.mxu0 0.0
        %304 = vmatpush1.msra.mxu0 0.0
        %305 = vmatprep.subr.mxu0 0.0
        %306 = vmatpush1.msra.mxu0 0.0
        %307 = vmatprep.subr.mxu0 0.0
        %308 = vmatpush1.msra.mxu0 0.0
        %309 = vmatprep.subr.mxu0 0.0
        %310 = vmatpush1.msra.mxu0 0.0
        %311 = vmatprep.subr.mxu0 0.0
        %312 = vmatpush1.msra.mxu0 0.0
        %313 = vmatprep.subr.mxu0 0.0
        %314 = vmatpush1.msra.mxu0 0.0
        %315 = vmatprep.subr.mxu0 0.0
        %316 = vmatpush1.msra.mxu0 0.0
        %317 = vmatprep.subr.mxu0 0.0
        %318 = vmatpush1.msra.mxu0 0.0
        %319 = vmatprep.subr.mxu0 0.0
        %320 = vmatpush1.msra.mxu0 0.0
        %321 = vmatprep.subr.mxu0 0.0
        %322 = vmatpush1.msra.mxu0 0.0
        %323 = vmatprep.subr.mxu0 0.0
        %324 = vmatpush1.msra.mxu0 0.0
        %325 = vmatprep.subr.mxu0 0.0
        %326 = vmatpush1.msra.mxu0 0.0
        %327 = vmatprep.subr.mxu0 0.0
        %328 = vmatpush1.msra.mxu0 0.0
        %329 = vmatprep.subr.mxu0 0.0
        %330 = vmatpush1.msra.mxu0 %v273
        %331 = vmatprep.subr.mxu0 0.0
        %332 = vmatpush2.msra.mxu0 0.0
        %333 = vmatprep.subr.mxu0 0.0
        %334 = vmatpush2.msra.mxu0 0.0
        %335 = vmatprep.subr.mxu0 0.0
        %336 = vmatpush2.msra.mxu0 0.0
        %337 = vmatprep.subr.mxu0 0.0
        %338 = vmatpush2.msra.mxu0 0.0
        %339 = vmatprep.subr.mxu0 0.0
        %340 = vmatpush2.msra.mxu0 0.0
        %341 = vmatprep.subr.mxu0 0.0
        %342 = vmatpush2.msra.mxu0 0.0
        %343 = vmatprep.subr.mxu0 0.0
        %344 = vmatpush2.msra.mxu0 0.0
        %345 = vmatprep.subr.mxu0 0.0
        %346 = vmatpush2.msra.mxu0 0.0
        %347 = vmatprep.subr.mxu0 0.0
        %348 = vmatpush2.msra.mxu0 0.0
        %349 = vmatprep.subr.mxu0 0.0
        %350 = vmatpush2.msra.mxu0 0.0
        %351 = vmatprep.subr.mxu0 0.0
        %352 = vmatpush2.msra.mxu0 0.0
        %353 = vmatprep.subr.mxu0 0.0
        %354 = vmatpush2.msra.mxu0 0.0
        %355 = vmatprep.subr.mxu0 0.0
        %356 = vmatpush2.msra.mxu0 0.0
        %357 = vmatprep.subr.mxu0 0.0
        %358 = vmatpush2.msra.mxu0 0.0
        %359 = vmatprep.subr.mxu0 0.0
        %360 = vmatpush2.msra.mxu0 0.0
        %361 = vmatprep.subr.mxu0 0.0
        %362 = vmatpush2.msra.mxu0 0.0
        %363 = vmatprep.mubr.f32.mxu0 0.0
        %364 = vmatmul.mubr.f32.gmra.mxu0 %v276
        %v365 = vpop.f32.mrf.mxu0
        %v366 = vadd.f32 0.0, %v365
        %v367 = vpop.f32.mrf.mxu0
        %368 = vmatprep.mubr.f32.mxu0 0.0
        %369 = vmatmul.mubr.f32.gmra.mxu0 %v279
        %v370 = vpop.f32.mrf.mxu0
        %v371 = vadd.f32 0.0, %v370
        %v372 = vpop.f32.mrf.mxu0
        %373 = vmatprep.mubr.f32.mxu0 0.0
        %374 = vmatmul.mubr.f32.gmra.mxu0 %v282
        %v375 = vpop.f32.mrf.mxu0
        %v376 = vadd.f32 0.0, %v375
        %v377 = vpop.f32.mrf.mxu0
        %378 = vmatprep.mubr.f32.mxu0 0.0
        %379 = vmatmul.mubr.f32.gmra.mxu0 %v285
        %v380 = vpop.f32.mrf.mxu0
        %v381 = vadd.f32 0.0, %v380
        %v382 = vpop.f32.mrf.mxu0
        %383 = vmatprep.mubr.f32.mxu0 0.0
        %384 = vmatmul.mubr.f32.gmra.mxu0 %v288
        %v385 = vpop.f32.mrf.mxu0
        %v386 = vadd.f32 0.0, %v385
        %v387 = vpop.f32.mrf.mxu0
        %388 = vmatprep.mubr.f32.mxu0 0.0
        %389 = vmatmul.mubr.f32.gmra.mxu0 %v291
        %v390 = vpop.f32.mrf.mxu0
        %v391 = vadd.f32 0.0, %v390
        %v392 = vpop.f32.mrf.mxu0
        %393 = vmatprep.mubr.f32.mxu0 0.0
        %394 = vmatmul.mubr.f32.gmra.mxu0 %v294
        %v395 = vpop.f32.mrf.mxu0
        %v396 = vadd.f32 0.0, %v395
        %v397 = vpop.f32.mrf.mxu0
        %398 = vmatprep.mubr.f32.mxu0 0.0
        %399 = vmatmul.mubr.f32.gmra.mxu0 %v297
        %v400 = vpop.f32.mrf.mxu0
        %v401 = vadd.f32 0.0, %v400
        %v402 = vpop.f32.mrf.mxu0
        %403 = vdwg.mxu0
        %v404 = vld [vmem:[%s1] sm:$0xff]
        %v405 = vld [vmem:[%s1 + $0x8] sm:$0xff]
        %v407 = vsel %vm274, %v404, 0
        %v410 = vsel %vm274, %v405, 0
        %412 = vmatprep.subr.mxu0 0.0
        %413 = vmatpush1.msra.mxu0 0.0
        %414 = vmatprep.subr.mxu0 0.0
        %415 = vmatpush1.msra.mxu0 0.0
        %416 = vmatprep.subr.mxu0 0.0
        %417 = vmatpush1.msra.mxu0 0.0
        %418 = vmatprep.subr.mxu0 0.0
        %419 = vmatpush1.msra.mxu0 0.0
        %420 = vmatprep.subr.mxu0 0.0
        %421 = vmatpush1.msra.mxu0 0.0
        %422 = vmatprep.subr.mxu0 0.0
        %423 = vmatpush1.msra.mxu0 0.0
        %424 = vmatprep.subr.mxu0 0.0
        %425 = vmatpush1.msra.mxu0 0.0
        %426 = vmatprep.subr.mxu0 0.0
        %427 = vmatpush1.msra.mxu0 0.0
        %428 = vmatprep.subr.mxu0 0.0
        %429 = vmatpush1.msra.mxu0 0.0
        %430 = vmatprep.subr.mxu0 0.0
        %431 = vmatpush1.msra.mxu0 0.0
        %432 = vmatprep.subr.mxu0 0.0
        %433 = vmatpush1.msra.mxu0 0.0
        %434 = vmatprep.subr.mxu0 0.0
        %435 = vmatpush1.msra.mxu0 0.0
        %436 = vmatprep.subr.mxu0 0.0
        %437 = vmatpush1.msra.mxu0 0.0
        %438 = vmatprep.subr.mxu0 0.0
        %439 = vmatpush1.msra.mxu0 0.0
        %440 = vmatprep.subr.mxu0 0.0
        %441 = vmatpush1.msra.mxu0 0.0
        %442 = vmatprep.subr.mxu0 0.0
        %443 = vmatpush1.msra.mxu0 %v366
        %444 = vmatprep.subr.mxu0 0.0
        %445 = vmatpush2.msra.mxu0 0.0
        %446 = vmatprep.subr.mxu0 0.0
        %447 = vmatpush2.msra.mxu0 0.0
        %448 = vmatprep.subr.mxu0 0.0
        %449 = vmatpush2.msra.mxu0 0.0
        %450 = vmatprep.subr.mxu0 0.0
        %451 = vmatpush2.msra.mxu0 0.0
        %452 = vmatprep.subr.mxu0 0.0
        %453 = vmatpush2.msra.mxu0 0.0
        %454 = vmatprep.subr.mxu0 0.0
        %455 = vmatpush2.msra.mxu0 0.0
        %456 = vmatprep.subr.mxu0 0.0
        %457 = vmatpush2.msra.mxu0 0.0
        %458 = vmatprep.subr.mxu0 0.0
        %459 = vmatpush2.msra.mxu0 0.0
        %460 = vmatprep.subr.mxu0 0.0
        %461 = vmatpush2.msra.mxu0 0.0
        %462 = vmatprep.subr.mxu0 0.0
        %463 = vmatpush2.msra.mxu0 0.0
        %464 = vmatprep.subr.mxu0 0.0
        %465 = vmatpush2.msra.mxu0 0.0
        %466 = vmatprep.subr.mxu0 0.0
        %467 = vmatpush2.msra.mxu0 0.0
        %468 = vmatprep.subr.mxu0 0.0
        %469 = vmatpush2.msra.mxu0 0.0
        %470 = vmatprep.subr.mxu0 0.0
        %471 = vmatpush2.msra.mxu0 0.0
        %472 = vmatprep.subr.mxu0 0.0
        %473 = vmatpush2.msra.mxu0 0.0
        %474 = vmatprep.subr.mxu0 0.0
        %475 = vmatpush2.msra.mxu0 0.0
        %476 = vmatprep.mubr.f32.mxu0 0.0
        %477 = vmatmul.mubr.f32.gmra.mxu0 %v407
        %v478 = vpop.f32.mrf.mxu0
        %v479 = vadd.f32 0.0, %v478
        %v480 = vpop.f32.mrf.mxu0
        %481 = vmatprep.mubr.f32.mxu0 0.0
        %482 = vmatmul.mubr.f32.gmra.mxu0 %v410
        %v483 = vpop.f32.mrf.mxu0
        %v484 = vadd.f32 0.0, %v483
        %v485 = vpop.f32.mrf.mxu0
        %486 = vdwg.mxu0
        %487 = vmatprep.subr.mxu0 0.0
        %488 = vmatpush1.msra.mxu0 0.0
        %489 = vmatprep.subr.mxu0 0.0
        %490 = vmatpush1.msra.mxu0 0.0
        %491 = vmatprep.subr.mxu0 0.0
        %492 = vmatpush1.msra.mxu0 0.0
        %493 = vmatprep.subr.mxu0 0.0
        %494 = vmatpush1.msra.mxu0 0.0
        %495 = vmatprep.subr.mxu0 0.0
        %496 = vmatpush1.msra.mxu0 0.0
        %497 = vmatprep.subr.mxu0 0.0
        %498 = vmatpush1.msra.mxu0 0.0
        %499 = vmatprep.subr.mxu0 0.0
        %500 = vmatpush1.msra.mxu0 0.0
        %501 = vmatprep.subr.mxu0 0.0
        %502 = vmatpush1.msra.mxu0 0.0
        %503 = vmatprep.subr.mxu0 0.0
        %504 = vmatpush1.msra.mxu0 0.0
        %505 = vmatprep.subr.mxu0 0.0
        %506 = vmatpush1.msra.mxu0 0.0
        %507 = vmatprep.subr.mxu0 0.0
        %508 = vmatpush1.msra.mxu0 0.0
        %509 = vmatprep.subr.mxu0 0.0
        %510 = vmatpush1.msra.mxu0 0.0
        %511 = vmatprep.subr.mxu0 0.0
        %512 = vmatpush1.msra.mxu0 0.0
        %513 = vmatprep.subr.mxu0 0.0
        %514 = vmatpush1.msra.mxu0 0.0
        %515 = vmatprep.subr.mxu0 0.0
        %516 = vmatpush1.msra.mxu0 0.0
        %517 = vmatprep.subr.mxu0 0.0
        %518 = vmatpush1.msra.mxu0 %v371
        %519 = vmatprep.subr.mxu0 0.0
        %520 = vmatpush2.msra.mxu0 0.0
        %521 = vmatprep.subr.mxu0 0.0
        %522 = vmatpush2.msra.mxu0 0.0
        %523 = vmatprep.subr.mxu0 0.0
        %524 = vmatpush2.msra.mxu0 0.0
        %525 = vmatprep.subr.mxu0 0.0
        %526 = vmatpush2.msra.mxu0 0.0
        %527 = vmatprep.subr.mxu0 0.0
        %528 = vmatpush2.msra.mxu0 0.0
        %529 = vmatprep.subr.mxu0 0.0
        %530 = vmatpush2.msra.mxu0 0.0
        %531 = vmatprep.subr.mxu0 0.0
        %532 = vmatpush2.msra.mxu0 0.0
        %533 = vmatprep.subr.mxu0 0.0
        %534 = vmatpush2.msra.mxu0 0.0
        %535 = vmatprep.subr.mxu0 0.0
        %536 = vmatpush2.msra.mxu0 0.0
        %537 = vmatprep.subr.mxu0 0.0
        %538 = vmatpush2.msra.mxu0 0.0
        %539 = vmatprep.subr.mxu0 0.0
        %540 = vmatpush2.msra.mxu0 0.0
        %541 = vmatprep.subr.mxu0 0.0
        %542 = vmatpush2.msra.mxu0 0.0
        %543 = vmatprep.subr.mxu0 0.0
        %544 = vmatpush2.msra.mxu0 0.0
        %545 = vmatprep.subr.mxu0 0.0
        %546 = vmatpush2.msra.mxu0 0.0
        %547 = vmatprep.subr.mxu0 0.0
        %548 = vmatpush2.msra.mxu0 0.0
        %549 = vmatprep.subr.mxu0 0.0
        %550 = vmatpush2.msra.mxu0 0.0
        %551 = vmatprep.mubr.f32.mxu0 0.0
        %552 = vmatmul.mubr.f32.gmra.mxu0 %v407
        %v553 = vpop.f32.mrf.mxu0
        %v554 = vadd.f32 0.0, %v553
        %v555 = vpop.f32.mrf.mxu0
        %556 = vmatprep.mubr.f32.mxu0 0.0
        %557 = vmatmul.mubr.f32.gmra.mxu0 %v410
        %v558 = vpop.f32.mrf.mxu0
        %v559 = vadd.f32 0.0, %v558
        %v560 = vpop.f32.mrf.mxu0
        %561 = vdwg.mxu0
        %562 = vmatprep.subr.mxu0 0.0
        %563 = vmatpush1.msra.mxu0 0.0
        %564 = vmatprep.subr.mxu0 0.0
        %565 = vmatpush1.msra.mxu0 0.0
        %566 = vmatprep.subr.mxu0 0.0
        %567 = vmatpush1.msra.mxu0 0.0
        %568 = vmatprep.subr.mxu0 0.0
        %569 = vmatpush1.msra.mxu0 0.0
        %570 = vmatprep.subr.mxu0 0.0
        %571 = vmatpush1.msra.mxu0 0.0
        %572 = vmatprep.subr.mxu0 0.0
        %573 = vmatpush1.msra.mxu0 0.0
        %574 = vmatprep.subr.mxu0 0.0
        %575 = vmatpush1.msra.mxu0 0.0
        %576 = vmatprep.subr.mxu0 0.0
        %577 = vmatpush1.msra.mxu0 0.0
        %578 = vmatprep.subr.mxu0 0.0
        %579 = vmatpush1.msra.mxu0 0.0
        %580 = vmatprep.subr.mxu0 0.0
        %581 = vmatpush1.msra.mxu0 0.0
        %582 = vmatprep.subr.mxu0 0.0
        %583 = vmatpush1.msra.mxu0 0.0
        %584 = vmatprep.subr.mxu0 0.0
        %585 = vmatpush1.msra.mxu0 0.0
        %586 = vmatprep.subr.mxu0 0.0
        %587 = vmatpush1.msra.mxu0 0.0
        %588 = vmatprep.subr.mxu0 0.0
        %589 = vmatpush1.msra.mxu0 0.0
        %590 = vmatprep.subr.mxu0 0.0
        %591 = vmatpush1.msra.mxu0 0.0
        %592 = vmatprep.subr.mxu0 0.0
        %593 = vmatpush1.msra.mxu0 %v376
        %594 = vmatprep.subr.mxu0 0.0
        %595 = vmatpush2.msra.mxu0 0.0
        %596 = vmatprep.subr.mxu0 0.0
        %597 = vmatpush2.msra.mxu0 0.0
        %598 = vmatprep.subr.mxu0 0.0
        %599 = vmatpush2.msra.mxu0 0.0
        %600 = vmatprep.subr.mxu0 0.0
        %601 = vmatpush2.msra.mxu0 0.0
        %602 = vmatprep.subr.mxu0 0.0
        %603 = vmatpush2.msra.mxu0 0.0
        %604 = vmatprep.subr.mxu0 0.0
        %605 = vmatpush2.msra.mxu0 0.0
        %606 = vmatprep.subr.mxu0 0.0
        %607 = vmatpush2.msra.mxu0 0.0
        %608 = vmatprep.subr.mxu0 0.0
        %609 = vmatpush2.msra.mxu0 0.0
        %610 = vmatprep.subr.mxu0 0.0
        %611 = vmatpush2.msra.mxu0 0.0
        %612 = vmatprep.subr.mxu0 0.0
        %613 = vmatpush2.msra.mxu0 0.0
        %614 = vmatprep.subr.mxu0 0.0
        %615 = vmatpush2.msra.mxu0 0.0
        %616 = vmatprep.subr.mxu0 0.0
        %617 = vmatpush2.msra.mxu0 0.0
        %618 = vmatprep.subr.mxu0 0.0
        %619 = vmatpush2.msra.mxu0 0.0
        %620 = vmatprep.subr.mxu0 0.0
        %621 = vmatpush2.msra.mxu0 0.0
        %622 = vmatprep.subr.mxu0 0.0
        %623 = vmatpush2.msra.mxu0 0.0
        %624 = vmatprep.subr.mxu0 0.0
        %625 = vmatpush2.msra.mxu0 0.0
        %626 = vmatprep.mubr.f32.mxu0 0.0
        %627 = vmatmul.mubr.f32.gmra.mxu0 %v407
        %v628 = vpop.f32.mrf.mxu0
        %v629 = vadd.f32 0.0, %v628
        %v630 = vpop.f32.mrf.mxu0
        %631 = vmatprep.mubr.f32.mxu0 0.0
        %632 = vmatmul.mubr.f32.gmra.mxu0 %v410
        %v633 = vpop.f32.mrf.mxu0
        %v634 = vadd.f32 0.0, %v633
        %v635 = vpop.f32.mrf.mxu0
        %636 = vdwg.mxu0
        %637 = vmatprep.subr.mxu0 0.0
        %638 = vmatpush1.msra.mxu0 0.0
        %639 = vmatprep.subr.mxu0 0.0
        %640 = vmatpush1.msra.mxu0 0.0
        %641 = vmatprep.subr.mxu0 0.0
        %642 = vmatpush1.msra.mxu0 0.0
        %643 = vmatprep.subr.mxu0 0.0
        %644 = vmatpush1.msra.mxu0 0.0
        %645 = vmatprep.subr.mxu0 0.0
        %646 = vmatpush1.msra.mxu0 0.0
        %647 = vmatprep.subr.mxu0 0.0
        %648 = vmatpush1.msra.mxu0 0.0
        %649 = vmatprep.subr.mxu0 0.0
        %650 = vmatpush1.msra.mxu0 0.0
        %651 = vmatprep.subr.mxu0 0.0
        %652 = vmatpush1.msra.mxu0 0.0
        %653 = vmatprep.subr.mxu0 0.0
        %654 = vmatpush1.msra.mxu0 0.0
        %655 = vmatprep.subr.mxu0 0.0
        %656 = vmatpush1.msra.mxu0 0.0
        %657 = vmatprep.subr.mxu0 0.0
        %658 = vmatpush1.msra.mxu0 0.0
        %659 = vmatprep.subr.mxu0 0.0
        %660 = vmatpush1.msra.mxu0 0.0
        %661 = vmatprep.subr.mxu0 0.0
        %662 = vmatpush1.msra.mxu0 0.0
        %663 = vmatprep.subr.mxu0 0.0
        %664 = vmatpush1.msra.mxu0 0.0
        %665 = vmatprep.subr.mxu0 0.0
        %666 = vmatpush1.msra.mxu0 0.0
        %667 = vmatprep.subr.mxu0 0.0
        %668 = vmatpush1.msra.mxu0 %v381
        %669 = vmatprep.subr.mxu0 0.0
        %670 = vmatpush2.msra.mxu0 0.0
        %671 = vmatprep.subr.mxu0 0.0
        %672 = vmatpush2.msra.mxu0 0.0
        %673 = vmatprep.subr.mxu0 0.0
        %674 = vmatpush2.msra.mxu0 0.0
        %675 = vmatprep.subr.mxu0 0.0
        %676 = vmatpush2.msra.mxu0 0.0
        %677 = vmatprep.subr.mxu0 0.0
        %678 = vmatpush2.msra.mxu0 0.0
        %679 = vmatprep.subr.mxu0 0.0
        %680 = vmatpush2.msra.mxu0 0.0
        %681 = vmatprep.subr.mxu0 0.0
        %682 = vmatpush2.msra.mxu0 0.0
        %683 = vmatprep.subr.mxu0 0.0
        %684 = vmatpush2.msra.mxu0 0.0
        %685 = vmatprep.subr.mxu0 0.0
        %686 = vmatpush2.msra.mxu0 0.0
        %687 = vmatprep.subr.mxu0 0.0
        %688 = vmatpush2.msra.mxu0 0.0
        %689 = vmatprep.subr.mxu0 0.0
        %690 = vmatpush2.msra.mxu0 0.0
        %691 = vmatprep.subr.mxu0 0.0
        %692 = vmatpush2.msra.mxu0 0.0
        %693 = vmatprep.subr.mxu0 0.0
        %694 = vmatpush2.msra.mxu0 0.0
        %695 = vmatprep.subr.mxu0 0.0
        %696 = vmatpush2.msra.mxu0 0.0
        %697 = vmatprep.subr.mxu0 0.0
        %698 = vmatpush2.msra.mxu0 0.0
        %699 = vmatprep.subr.mxu0 0.0
        %700 = vmatpush2.msra.mxu0 0.0
        %701 = vmatprep.mubr.f32.mxu0 0.0
        %702 = vmatmul.mubr.f32.gmra.mxu0 %v407
        %v703 = vpop.f32.mrf.mxu0
        %v704 = vadd.f32 0.0, %v703
        %v705 = vpop.f32.mrf.mxu0
        %706 = vmatprep.mubr.f32.mxu0 0.0
        %707 = vmatmul.mubr.f32.gmra.mxu0 %v410
        %v708 = vpop.f32.mrf.mxu0
        %v709 = vadd.f32 0.0, %v708
        %v710 = vpop.f32.mrf.mxu0
        %711 = vdwg.mxu0
        %712 = vmatprep.subr.mxu0 0.0
        %713 = vmatpush1.msra.mxu0 0.0
        %714 = vmatprep.subr.mxu0 0.0
        %715 = vmatpush1.msra.mxu0 0.0
        %716 = vmatprep.subr.mxu0 0.0
        %717 = vmatpush1.msra.mxu0 0.0
        %718 = vmatprep.subr.mxu0 0.0
        %719 = vmatpush1.msra.mxu0 0.0
        %720 = vmatprep.subr.mxu0 0.0
        %721 = vmatpush1.msra.mxu0 0.0
        %722 = vmatprep.subr.mxu0 0.0
        %723 = vmatpush1.msra.mxu0 0.0
        %724 = vmatprep.subr.mxu0 0.0
        %725 = vmatpush1.msra.mxu0 0.0
        %726 = vmatprep.subr.mxu0 0.0
        %727 = vmatpush1.msra.mxu0 0.0
        %728 = vmatprep.subr.mxu0 0.0
        %729 = vmatpush1.msra.mxu0 0.0
        %730 = vmatprep.subr.mxu0 0.0
        %731 = vmatpush1.msra.mxu0 0.0
        %732 = vmatprep.subr.mxu0 0.0
        %733 = vmatpush1.msra.mxu0 0.0
        %734 = vmatprep.subr.mxu0 0.0
        %735 = vmatpush1.msra.mxu0 0.0
        %736 = vmatprep.subr.mxu0 0.0
        %737 = vmatpush1.msra.mxu0 0.0
        %738 = vmatprep.subr.mxu0 0.0
        %739 = vmatpush1.msra.mxu0 0.0
        %740 = vmatprep.subr.mxu0 0.0
        %741 = vmatpush1.msra.mxu0 0.0
        %742 = vmatprep.subr.mxu0 0.0
        %743 = vmatpush1.msra.mxu0 %v386
        %744 = vmatprep.subr.mxu0 0.0
        %745 = vmatpush2.msra.mxu0 0.0
        %746 = vmatprep.subr.mxu0 0.0
        %747 = vmatpush2.msra.mxu0 0.0
        %748 = vmatprep.subr.mxu0 0.0
        %749 = vmatpush2.msra.mxu0 0.0
        %750 = vmatprep.subr.mxu0 0.0
        %751 = vmatpush2.msra.mxu0 0.0
        %752 = vmatprep.subr.mxu0 0.0
        %753 = vmatpush2.msra.mxu0 0.0
        %754 = vmatprep.subr.mxu0 0.0
        %755 = vmatpush2.msra.mxu0 0.0
        %756 = vmatprep.subr.mxu0 0.0
        %757 = vmatpush2.msra.mxu0 0.0
        %758 = vmatprep.subr.mxu0 0.0
        %759 = vmatpush2.msra.mxu0 0.0
        %760 = vmatprep.subr.mxu0 0.0
        %761 = vmatpush2.msra.mxu0 0.0
        %762 = vmatprep.subr.mxu0 0.0
        %763 = vmatpush2.msra.mxu0 0.0
        %764 = vmatprep.subr.mxu0 0.0
        %765 = vmatpush2.msra.mxu0 0.0
        %766 = vmatprep.subr.mxu0 0.0
        %767 = vmatpush2.msra.mxu0 0.0
        %768 = vmatprep.subr.mxu0 0.0
        %769 = vmatpush2.msra.mxu0 0.0
        %770 = vmatprep.subr.mxu0 0.0
        %771 = vmatpush2.msra.mxu0 0.0
        %772 = vmatprep.subr.mxu0 0.0
        %773 = vmatpush2.msra.mxu0 0.0
        %774 = vmatprep.subr.mxu0 0.0
        %775 = vmatpush2.msra.mxu0 0.0
        %776 = vmatprep.mubr.f32.mxu0 0.0
        %777 = vmatmul.mubr.f32.gmra.mxu0 %v407
        %v778 = vpop.f32.mrf.mxu0
        %v779 = vadd.f32 0.0, %v778
        %v780 = vpop.f32.mrf.mxu0
        %781 = vmatprep.mubr.f32.mxu0 0.0
        %782 = vmatmul.mubr.f32.gmra.mxu0 %v410
        %v783 = vpop.f32.mrf.mxu0
        %v784 = vadd.f32 0.0, %v783
        %v785 = vpop.f32.mrf.mxu0
        %786 = vdwg.mxu0
        %787 = vmatprep.subr.mxu0 0.0
        %788 = vmatpush1.msra.mxu0 0.0
        %789 = vmatprep.subr.mxu0 0.0
        %790 = vmatpush1.msra.mxu0 0.0
        %791 = vmatprep.subr.mxu0 0.0
        %792 = vmatpush1.msra.mxu0 0.0
        %793 = vmatprep.subr.mxu0 0.0
        %794 = vmatpush1.msra.mxu0 0.0
        %795 = vmatprep.subr.mxu0 0.0
        %796 = vmatpush1.msra.mxu0 0.0
        %797 = vmatprep.subr.mxu0 0.0
        %798 = vmatpush1.msra.mxu0 0.0
        %799 = vmatprep.subr.mxu0 0.0
        %800 = vmatpush1.msra.mxu0 0.0
        %801 = vmatprep.subr.mxu0 0.0
        %802 = vmatpush1.msra.mxu0 0.0
        %803 = vmatprep.subr.mxu0 0.0
        %804 = vmatpush1.msra.mxu0 0.0
        %805 = vmatprep.subr.mxu0 0.0
        %806 = vmatpush1.msra.mxu0 0.0
        %807 = vmatprep.subr.mxu0 0.0
        %808 = vmatpush1.msra.mxu0 0.0
        %809 = vmatprep.subr.mxu0 0.0
        %810 = vmatpush1.msra.mxu0 0.0
        %811 = vmatprep.subr.mxu0 0.0
        %812 = vmatpush1.msra.mxu0 0.0
        %813 = vmatprep.subr.mxu0 0.0
        %814 = vmatpush1.msra.mxu0 0.0
        %815 = vmatprep.subr.mxu0 0.0
        %816 = vmatpush1.msra.mxu0 0.0
        %817 = vmatprep.subr.mxu0 0.0
        %818 = vmatpush1.msra.mxu0 %v391
        %819 = vmatprep.subr.mxu0 0.0
        %820 = vmatpush2.msra.mxu0 0.0
        %821 = vmatprep.subr.mxu0 0.0
        %822 = vmatpush2.msra.mxu0 0.0
        %823 = vmatprep.subr.mxu0 0.0
        %824 = vmatpush2.msra.mxu0 0.0
        %825 = vmatprep.subr.mxu0 0.0
        %826 = vmatpush2.msra.mxu0 0.0
        %827 = vmatprep.subr.mxu0 0.0
        %828 = vmatpush2.msra.mxu0 0.0
        %829 = vmatprep.subr.mxu0 0.0
        %830 = vmatpush2.msra.mxu0 0.0
        %831 = vmatprep.subr.mxu0 0.0
        %832 = vmatpush2.msra.mxu0 0.0
        %833 = vmatprep.subr.mxu0 0.0
        %834 = vmatpush2.msra.mxu0 0.0
        %835 = vmatprep.subr.mxu0 0.0
        %836 = vmatpush2.msra.mxu0 0.0
        %837 = vmatprep.subr.mxu0 0.0
        %838 = vmatpush2.msra.mxu0 0.0
        %839 = vmatprep.subr.mxu0 0.0
        %840 = vmatpush2.msra.mxu0 0.0
        %841 = vmatprep.subr.mxu0 0.0
        %842 = vmatpush2.msra.mxu0 0.0
        %843 = vmatprep.subr.mxu0 0.0
        %844 = vmatpush2.msra.mxu0 0.0
        %845 = vmatprep.subr.mxu0 0.0
        %846 = vmatpush2.msra.mxu0 0.0
        %847 = vmatprep.subr.mxu0 0.0
        %848 = vmatpush2.msra.mxu0 0.0
        %849 = vmatprep.subr.mxu0 0.0
        %850 = vmatpush2.msra.mxu0 0.0
        %851 = vmatprep.mubr.f32.mxu0 0.0
        %852 = vmatmul.mubr.f32.gmra.mxu0 %v407
        %v853 = vpop.f32.mrf.mxu0
        %v854 = vadd.f32 0.0, %v853
        %v855 = vpop.f32.mrf.mxu0
        %856 = vmatprep.mubr.f32.mxu0 0.0
        %857 = vmatmul.mubr.f32.gmra.mxu0 %v410
        %v858 = vpop.f32.mrf.mxu0
        %v859 = vadd.f32 0.0, %v858
        %v860 = vpop.f32.mrf.mxu0
        %861 = vdwg.mxu0
        %862 = vmatprep.subr.mxu0 0.0
        %863 = vmatpush1.msra.mxu0 0.0
        %864 = vmatprep.subr.mxu0 0.0
        %865 = vmatpush1.msra.mxu0 0.0
        %866 = vmatprep.subr.mxu0 0.0
        %867 = vmatpush1.msra.mxu0 0.0
        %868 = vmatprep.subr.mxu0 0.0
        %869 = vmatpush1.msra.mxu0 0.0
        %870 = vmatprep.subr.mxu0 0.0
        %871 = vmatpush1.msra.mxu0 0.0
        %872 = vmatprep.subr.mxu0 0.0
        %873 = vmatpush1.msra.mxu0 0.0
        %874 = vmatprep.subr.mxu0 0.0
        %875 = vmatpush1.msra.mxu0 0.0
        %876 = vmatprep.subr.mxu0 0.0
        %877 = vmatpush1.msra.mxu0 0.0
        %878 = vmatprep.subr.mxu0 0.0
        %879 = vmatpush1.msra.mxu0 0.0
        %880 = vmatprep.subr.mxu0 0.0
        %881 = vmatpush1.msra.mxu0 0.0
        %882 = vmatprep.subr.mxu0 0.0
        %883 = vmatpush1.msra.mxu0 0.0
        %884 = vmatprep.subr.mxu0 0.0
        %885 = vmatpush1.msra.mxu0 0.0
        %886 = vmatprep.subr.mxu0 0.0
        %887 = vmatpush1.msra.mxu0 0.0
        %888 = vmatprep.subr.mxu0 0.0
        %889 = vmatpush1.msra.mxu0 0.0
        %890 = vmatprep.subr.mxu0 0.0
        %891 = vmatpush1.msra.mxu0 0.0
        %892 = vmatprep.subr.mxu0 0.0
        %893 = vmatpush1.msra.mxu0 %v396
        %894 = vmatprep.subr.mxu0 0.0
        %895 = vmatpush2.msra.mxu0 0.0
        %896 = vmatprep.subr.mxu0 0.0
        %897 = vmatpush2.msra.mxu0 0.0
        %898 = vmatprep.subr.mxu0 0.0
        %899 = vmatpush2.msra.mxu0 0.0
        %900 = vmatprep.subr.mxu0 0.0
        %901 = vmatpush2.msra.mxu0 0.0
        %902 = vmatprep.subr.mxu0 0.0
        %903 = vmatpush2.msra.mxu0 0.0
        %904 = vmatprep.subr.mxu0 0.0
        %905 = vmatpush2.msra.mxu0 0.0
        %906 = vmatprep.subr.mxu0 0.0
        %907 = vmatpush2.msra.mxu0 0.0
        %908 = vmatprep.subr.mxu0 0.0
        %909 = vmatpush2.msra.mxu0 0.0
        %910 = vmatprep.subr.mxu0 0.0
        %911 = vmatpush2.msra.mxu0 0.0
        %912 = vmatprep.subr.mxu0 0.0
        %913 = vmatpush2.msra.mxu0 0.0
        %914 = vmatprep.subr.mxu0 0.0
        %915 = vmatpush2.msra.mxu0 0.0
        %916 = vmatprep.subr.mxu0 0.0
        %917 = vmatpush2.msra.mxu0 0.0
        %918 = vmatprep.subr.mxu0 0.0
        %919 = vmatpush2.msra.mxu0 0.0
        %920 = vmatprep.subr.mxu0 0.0
        %921 = vmatpush2.msra.mxu0 0.0
        %922 = vmatprep.subr.mxu0 0.0
        %923 = vmatpush2.msra.mxu0 0.0
        %924 = vmatprep.subr.mxu0 0.0
        %925 = vmatpush2.msra.mxu0 0.0
        %926 = vmatprep.mubr.f32.mxu0 0.0
        %927 = vmatmul.mubr.f32.gmra.mxu0 %v407
        %v928 = vpop.f32.mrf.mxu0
        %v929 = vadd.f32 0.0, %v928
        %v930 = vpop.f32.mrf.mxu0
        %931 = vmatprep.mubr.f32.mxu0 0.0
        %932 = vmatmul.mubr.f32.gmra.mxu0 %v410
        %v933 = vpop.f32.mrf.mxu0
        %v934 = vadd.f32 0.0, %v933
        %v935 = vpop.f32.mrf.mxu0
        %936 = vdwg.mxu0
        %937 = vmatprep.subr.mxu0 0.0
        %938 = vmatpush1.msra.mxu0 0.0
        %939 = vmatprep.subr.mxu0 0.0
        %940 = vmatpush1.msra.mxu0 0.0
        %941 = vmatprep.subr.mxu0 0.0
        %942 = vmatpush1.msra.mxu0 0.0
        %943 = vmatprep.subr.mxu0 0.0
        %944 = vmatpush1.msra.mxu0 0.0
        %945 = vmatprep.subr.mxu0 0.0
        %946 = vmatpush1.msra.mxu0 0.0
        %947 = vmatprep.subr.mxu0 0.0
        %948 = vmatpush1.msra.mxu0 0.0
        %949 = vmatprep.subr.mxu0 0.0
        %950 = vmatpush1.msra.mxu0 0.0
        %951 = vmatprep.subr.mxu0 0.0
        %952 = vmatpush1.msra.mxu0 0.0
        %953 = vmatprep.subr.mxu0 0.0
        %954 = vmatpush1.msra.mxu0 0.0
        %955 = vmatprep.subr.mxu0 0.0
        %956 = vmatpush1.msra.mxu0 0.0
        %957 = vmatprep.subr.mxu0 0.0
        %958 = vmatpush1.msra.mxu0 0.0
        %959 = vmatprep.subr.mxu0 0.0
        %960 = vmatpush1.msra.mxu0 0.0
        %961 = vmatprep.subr.mxu0 0.0
        %962 = vmatpush1.msra.mxu0 0.0
        %963 = vmatprep.subr.mxu0 0.0
        %964 = vmatpush1.msra.mxu0 0.0
        %965 = vmatprep.subr.mxu0 0.0
        %966 = vmatpush1.msra.mxu0 0.0
        %967 = vmatprep.subr.mxu0 0.0
        %968 = vmatpush1.msra.mxu0 %v401
        %969 = vmatprep.subr.mxu0 0.0
        %970 = vmatpush2.msra.mxu0 0.0
        %971 = vmatprep.subr.mxu0 0.0
        %972 = vmatpush2.msra.mxu0 0.0
        %973 = vmatprep.subr.mxu0 0.0
        %974 = vmatpush2.msra.mxu0 0.0
        %975 = vmatprep.subr.mxu0 0.0
        %976 = vmatpush2.msra.mxu0 0.0
        %977 = vmatprep.subr.mxu0 0.0
        %978 = vmatpush2.msra.mxu0 0.0
        %979 = vmatprep.subr.mxu0 0.0
        %980 = vmatpush2.msra.mxu0 0.0
        %981 = vmatprep.subr.mxu0 0.0
        %982 = vmatpush2.msra.mxu0 0.0
        %983 = vmatprep.subr.mxu0 0.0
        %984 = vmatpush2.msra.mxu0 0.0
        %985 = vmatprep.subr.mxu0 0.0
        %986 = vmatpush2.msra.mxu0 0.0
        %987 = vmatprep.subr.mxu0 0.0
        %988 = vmatpush2.msra.mxu0 0.0
        %989 = vmatprep.subr.mxu0 0.0
        %990 = vmatpush2.msra.mxu0 0.0
        %991 = vmatprep.subr.mxu0 0.0
        %992 = vmatpush2.msra.mxu0 0.0
        %993 = vmatprep.subr.mxu0 0.0
        %994 = vmatpush2.msra.mxu0 0.0
        %995 = vmatprep.subr.mxu0 0.0
        %996 = vmatpush2.msra.mxu0 0.0
        %997 = vmatprep.subr.mxu0 0.0
        %998 = vmatpush2.msra.mxu0 0.0
        %999 = vmatprep.subr.mxu0 0.0
        %1000 = vmatpush2.msra.mxu0 0.0
        %1001 = vmatprep.mubr.f32.mxu0 0.0
        %1002 = vmatmul.mubr.f32.gmra.mxu0 %v407
        %v1003 = vpop.f32.mrf.mxu0
        %v1004 = vadd.f32 0.0, %v1003
        %v1005 = vpop.f32.mrf.mxu0
        %1006 = vmatprep.mubr.f32.mxu0 0.0
        %1007 = vmatmul.mubr.f32.gmra.mxu0 %v410
        %v1008 = vpop.f32.mrf.mxu0
        %v1009 = vadd.f32 0.0, %v1008
        %v1010 = vpop.f32.mrf.mxu0
        %1011 = vdwg.mxu0
        %vm1012 = vcmask 130048
        %1013 = vst.msk [vmem:[%s263] sm:$0xff] %vm1012, %v479
        %1014 = vst.msk [vmem:[%s263 + $0x8] sm:$0xff] %vm1012, %v484
        %1015 = vst.msk [vmem:[%s263 + $0x10] sm:$0xff] %vm1012, %v554
        %1016 = vst.msk [vmem:[%s263 + $0x18] sm:$0xff] %vm1012, %v559
        %1017 = vst.msk [vmem:[%s263 + $0x20] sm:$0xff] %vm1012, %v629
        %1018 = vst.msk [vmem:[%s263 + $0x28] sm:$0xff] %vm1012, %v634
        %1019 = vst.msk [vmem:[%s263 + $0x30] sm:$0xff] %vm1012, %v704
        %1020 = vst.msk [vmem:[%s263 + $0x38] sm:$0xff] %vm1012, %v709
        %1021 = vst.msk [vmem:[%s263 + $0x40] sm:$0xff] %vm1012, %v779
        %1022 = vst.msk [vmem:[%s263 + $0x48] sm:$0xff] %vm1012, %v784
        %1023 = vst.msk [vmem:[%s263 + $0x50] sm:$0xff] %vm1012, %v854
        %1024 = vst.msk [vmem:[%s263 + $0x58] sm:$0xff] %vm1012, %v859
        %1025 = vst.msk [vmem:[%s263 + $0x60] sm:$0xff] %vm1012, %v929
        %1026 = vst.msk [vmem:[%s263 + $0x68] sm:$0xff] %vm1012, %v934
        %1027 = vst.msk [vmem:[%s263 + $0x70] sm:$0xff] %vm1012, %v1004
        %1028 = vst.msk [vmem:[%s263 + $0x78] sm:$0xff] %vm1012, %v1009
        %s1029 = smul.u32 8, %s19
        %p1030 = scmp.lt.s32.totalorder %s18, 1
        %s1031 = scalar_select %p1030, %s18, 1
        %p1032 = scmp.lt.s32.totalorder %s1029, 7
        %s1033 = scalar_select %p1032, %s1029, 7
        %s1034 = smul.addr %s1033, 2
        %s1035 = smul.addr %s1031, 16
        %s1036 = sadd.s32 %s1034, %s1035
        %s1037 = smul.addr %s1036, 8
        %s1038 = scalar_lea.vmem %s3, %s1037
        // Predicated region
        $region71: #{segmentation_forward.3} parent=65 // pred_check
          %p1039 = pneg %p116
        $region72: #{segmentation_forward.3} parent=65 // pred_check_branch
          %1041 = sbr.rel (%p1039) target = $region74
        $region73: #{segmentation_forward.3} parent=65 // pred_region
          %s1042 = smul.u32 8, %s19
        $region74: #{segmentation_forward.3} parent=65 // pred_fallthru
          _
      $region66: #{segmentation_forward.3} parent=5 // pred_fallthru
        _
      %p1043 = scmp.le.s32.totalorder 2, %s9
      // Predicated region
      $region75: #{segmentation_forward.3} parent=5 // pred_check
        %p1044 = pneg %p1043
      $region76: #{segmentation_forward.3} parent=5 // pred_check_branch
        %1046 = sbr.rel (%p1044) target = $region78
      $region77: #{segmentation_forward.3} parent=5 // pred_region
        %s1047 = ssub.s32 %s9, 2
        // Predicated region
        $region79: #{segmentation_forward.3} parent=77 // pred_check
          %p1048 = pneg %p122
        $region80: #{segmentation_forward.3} parent=77 // pred_check_branch
          %1050 = sbr.rel (%p1048) target = $region82
        $region81: #{segmentation_forward.3} parent=77 // pred_region
          %s1051 = smul.u32 8, %s21
          %p1052 = scmp.lt.s32.totalorder %s20, 1
          %s1053 = scalar_select %p1052, %s20, 1
          %p1054 = scmp.lt.s32.totalorder %s1051, 7
          %s1055 = scalar_select %p1054, %s1051, 7
          %s1056 = smul.addr %s1055, 2
          %s1057 = smul.addr %s1053, 16
          %s1058 = sadd.s32 %s1056, %s1057
          %s1059 = smul.addr %s1058, 8
          %s1060 = scalar_lea.vmem %s3, %s1059
        $region82: #{segmentation_forward.3} parent=77 // pred_fallthru
          _
      $region78: #{segmentation_forward.3} parent=5 // pred_fallthru
        _
    $region6: #{segmentation_forward.3} parent=1 // loop_footer
      %s13 = sadd.s32 1, %s9
    $region7: #{segmentation_forward.3} parent=1 // loop_footer_branch
      %8 = sbr.rel target = $region3
    $region8: #{segmentation_forward.3} parent=1 // loop_exit
      _

</llo_original>
